<compile_context>
chip_gen: v6e
topology: v6e:2x2x1
jax: 0.10.0
libtpu: 0.0.40
codegen_flags: <defaults>
</compile_context>

<pallas_src>
import functools
import math

import jax
import jax.numpy as jnp
from jax.experimental import pallas as pl
from jax.experimental.pallas import tpu as pltpu

GL = 128          # per-head lane block: every gate / head lives at a 128-lane offset
G3 = 3 * GL       # packed 3-gate width


# ----------------------------- kernel helpers -------------------------------

def _gru_from_packed(gi, gh, h_carry):
    """nn.GRUCell from per-operand packed gate pre-activations.

    gi = x @ Wih_pack + [b_ir+b_hr | b_iz+b_hz | b_in]    (R, 384)
    gh = h @ Whh_pack + [0 | 0 | b_hn]                    (R, 384)
    h_carry: f32 (R, 128) previous hidden (lane-padded).  All math f32.
    """
    r = jax.nn.sigmoid(gi[:, 0:GL] + gh[:, 0:GL])
    u = jax.nn.sigmoid(gi[:, GL:2 * GL] + gh[:, GL:2 * GL])
    n = jnp.tanh(gi[:, 2 * GL:3 * GL] + r * gh[:, 2 * GL:3 * GL])
    return (1.0 - u) * n + u * h_carry


# --------------------------- fused forward kernel ----------------------------

def masia_fused_kernel(x_ref, eh_ref, h_ref, w384_ref, w128_ref, bias_ref,
                       zmask_ref, zrep_ref, out_ref, *, xpad):
    f32 = jnp.float32
    bf16 = jnp.bfloat16

    def dotb(a, w):
        # bf16 x bf16 MXU matmul, f32 accumulation
        return jnp.dot(a.astype(bf16), w, preferred_element_type=f32)

    x = x_ref[...]            # (R, xpad) f32
    eh = eh_ref[...]          # (R, 128) f32 encoder carry (lane-padded, pad lanes 0)
    h_in = h_ref[...]         # (R, 128) f32 policy carry

    # -- M1: every x-side linear head in ONE MXU push --
    #   lanes [0:128)   encoder fc (pre-ReLU)
    #   lanes [128:256) gate (pre-sigmoid)
    #   lanes [256:384) fc1 x-contribution (ob_fc folded + "extra" columns)
    m1 = dotb(x, w384_ref[0:xpad, :]) + bias_ref[0:1, :]
    ex = jnp.maximum(m1[:, 0:GL], 0.0)
    gate_pre = m1[:, GL:2 * GL]
    fc1_part = m1[:, 2 * GL:3 * GL]

    # -- encoder GRUCell: one push per operand, gates packed along lanes --
    gi_e = dotb(ex, w384_ref[xpad:xpad + GL, :]) + bias_ref[1:2, :]
    gh_e = dotb(eh, w384_ref[xpad + GL:xpad + 2 * GL, :]) + bias_ref[2:3, :]
    enc_h = _gru_from_packed(gi_e, gh_e, eh)                 # (R, 128) f32

    # -- z head (enc_wz tiled over agents) -> scatter to own latent block ->
    #    exact f32 batch replication with a block-local 0/1 matrix --
    z_pre = dotb(enc_h, w128_ref[0:GL, :]) + bias_ref[5:6, 0:GL]
    z_wide = z_pre * zmask_ref[...]
    rep_z = jnp.dot(zrep_ref[...], z_wide, preferred_element_type=f32)

    # -- gate * z -> fc1 -> ReLU  (ob_fc already inside fc1_part) --
    wz = jax.nn.sigmoid(gate_pre) * rep_z
    xx = jnp.maximum(fc1_part + dotb(wz, w128_ref[GL:2 * GL, :]), 0.0)

    # -- policy GRUCell --
    gi_r = dotb(xx, w384_ref[xpad + 2 * GL:xpad + 3 * GL, :]) + bias_ref[3:4, :]
    gh_r = dotb(h_in, w384_ref[xpad + 3 * GL:xpad + 4 * GL, :]) + bias_ref[4:5, :]
    h_new = _gru_from_packed(gi_r, gh_r, h_in)               # (R, 128) f32

    # -- q head --
    q = dotb(h_new, w128_ref[2 * GL:3 * GL, :]) + bias_ref[6:7, 0:GL]

    # -- lane-dense 3x128 output slab [h | enc_h | q]; carries stay f32 --
    out_ref[:, 0:GL] = h_new
    out_ref[:, GL:2 * GL] = enc_h
    out_ref[:, 2 * GL:3 * GL] = q


# ------------------------------- wrappers ------------------------------------

def _pick_rows(n_rows, n_agents):
    """Row-tile: whole batch groups, 8-sublane aligned, divides N, capped so the
    block-local (rows, rows) replication matrix stays small."""
    cap = 256
    if n_rows <= cap:
        return n_rows
    step = n_agents * 8 // math.gcd(n_agents, 8)   # lcm(8, n_agents)
    for r in range(cap - cap % step, step - 1, -step):
        if n_rows % r == 0:
            return r
    return n_rows


def prepare_kernel_params(p, cfg, bs):
    """Re-layout the (PyTorch-convention, gate-packed) params into 3 slabs."""
    n_agents = cfg["n_agents"]
    srd = cfg["state_repre_dim"]
    H = cfg["hidden_dim"]
    He = cfg["encoder_hidden_dim"]
    n_actions = cfg["n_actions"]
    raw = cfg["raw_input_shape"]
    latent = srd * n_agents
    N = bs * n_agents
    input_dim = p["gate_w"].shape[0]
    assert max(H, He, latent, n_actions) <= GL, "per-head width must fit one lane block"
    xpad = ((input_dim + 15) // 16) * 16            # bf16 sublane-tile aligned row count
    f32 = jnp.float32

    def pad2(a, rows, cols):
        return jnp.zeros((rows, cols), f32).at[:a.shape[0], :a.shape[1]].set(a)

    def gate_pack(w, hd):
        # (in, 3*hd) with [r|z|n] along columns -> (128, 384), gates at 128-lane offsets
        out = jnp.zeros((GL, G3), f32)
        for g in range(3):
            out = out.at[:w.shape[0], g * GL:g * GL + hd].set(w[:, g * hd:(g + 1) * hd])
        return out

    def gate_bias(bih, bhh, hd):
        bi = jnp.zeros((1, G3), f32)
        bh = jnp.zeros((1, G3), f32)
        bi = bi.at[:, 0:hd].set(bih[:, 0:hd] + bhh[:, 0:hd])                    # r
        bi = bi.at[:, GL:GL + hd].set(bih[:, hd:2 * hd] + bhh[:, hd:2 * hd])     # z
        bi = bi.at[:, 2 * GL:2 * GL + hd].set(bih[:, 2 * hd:3 * hd])             # n (input)
        bh = bh.at[:, 2 * GL:2 * GL + hd].set(bhh[:, 2 * hd:3 * hd])             # n (hidden)
        return bi, bh

    # -- fold ob_fc into fc1 host-side (f32) --
    ob_w_pad = jnp.zeros((input_dim, p["ob_w"].shape[1]), f32).at[:raw, :].set(p["ob_w"])
    wc_pad = jnp.zeros((input_dim, H), f32).at[raw:, :].set(p["fc1_wc"])
    w_comb = ob_w_pad @ p["fc1_wa"] + wc_pad              # (input_dim, H)
    fc1_b_comb = p["fc1_b"] + p["ob_b"] @ p["fc1_wa"]     # (1, H)

    # -- one packed RHS for every x-side matmul: [enc fc | gate | fc1(x-part)] --
    x_pack = jnp.zeros((xpad, G3), f32)
    x_pack = x_pack.at[:input_dim, 0:He].set(p["enc_w1"])
    x_pack = x_pack.at[:input_dim, GL:GL + latent].set(p["gate_w"])
    x_pack = x_pack.at[:input_dim, 2 * GL:2 * GL + H].set(w_comb)

    # -- single bf16 slab of all 384-wide RHS (row offsets multiples of 16) --
    w384 = jnp.concatenate(
        [x_pack,
         gate_pack(p["enc_wih"], He), gate_pack(p["enc_whh"], He),
         gate_pack(p["rnn_wih"], H), gate_pack(p["rnn_whh"], H)],
        axis=0).astype(jnp.bfloat16)

    # -- single bf16 slab of the 128-wide RHS: [z head (agent-tiled) | fc1_wb | fc2] --
    wz_t = jnp.tile(p["enc_wz"], (1, n_agents))           # (He, latent)
    w128 = jnp.concatenate(
        [pad2(wz_t, GL, GL), pad2(p["fc1_wb"], GL, GL), pad2(p["fc2_w"], GL, GL)],
        axis=0).astype(jnp.bfloat16)

    # -- all biases in one f32 (8, 384) slab --
    e_bi, e_bh = gate_bias(p["enc_bih"], p["enc_bhh"], He)
    r_bi, r_bh = gate_bias(p["rnn_bih"], p["rnn_bhh"], H)
    bx = jnp.zeros((1, G3), f32)
    bx = bx.at[:, 0:He].set(p["enc_b1"])
    bx = bx.at[:, GL:GL + latent].set(p["gate_b"])
    bx = bx.at[:, 2 * GL:2 * GL + H].set(fc1_b_comb)
    bz = jnp.zeros((1, G3), f32).at[:, 0:latent].set(jnp.tile(p["enc_bz"], (1, n_agents)))
    b2 = jnp.zeros((1, G3), f32).at[:, 0:n_actions].set(p["fc2_b"])
    bias = jnp.concatenate([bx, e_bi, e_bh, r_bi, r_bh, bz, b2,
                            jnp.zeros((1, G3), f32)], axis=0)

    # -- block-local z scatter mask + batch replication matrix (same for every block) --
    rows = _pick_rows(N, n_agents)
    r_idx = jnp.arange(rows)
    lane = jnp.arange(GL)
    zmask = (((lane[None, :] // srd) == (r_idx[:, None] % n_agents))
             & (lane[None, :] < latent)).astype(f32)                   # (rows, 128)
    grp = r_idx // n_agents
    zrep = (grp[:, None] == grp[None, :]).astype(f32)                  # (rows, rows)

    return dict(w384=w384, w128=w128, bias=bias, zmask=zmask, zrep=zrep)


def masia_forward(inputs, hidden_state, encoder_hidden_state, kp, cfg):
    """Full MASIAAgent.forward (chosen config) — one fused Pallas kernel."""
    H = cfg["hidden_dim"]
    He = cfg["encoder_hidden_dim"]
    n_actions = cfg["n_actions"]
    N, input_dim = inputs.shape
    xpad = kp["w384"].shape[0] - 4 * GL
    rows = kp["zrep"].shape[0]
    assert N % rows == 0, "row tile must divide batch*n_agents"

    x = jnp.pad(inputs, ((0, 0), (0, xpad - input_dim)))
    h_in = jnp.pad(hidden_state.reshape(-1, H), ((0, 0), (0, GL - H)))
    eh_in = jnp.pad(encoder_hidden_state, ((0, 0), (0, GL - He)))

    def row_spec(d):
        return pl.BlockSpec((rows, d), lambda i: (i, 0))

    def res_spec(a):
        return pl.BlockSpec(a.shape, lambda i: (0, 0))      # resident across grid steps

    tiled_bytes = rows * (xpad + GL + GL + G3) * 4
    resident_bytes = sum(int(a.size) * a.dtype.itemsize
                         for a in (kp["w384"], kp["w128"], kp["bias"],
                                   kp["zmask"], kp["zrep"]))
    vmem_limit = 2 * (tiled_bytes + resident_bytes) + (8 << 20)

    out = pl.pallas_call(
        functools.partial(masia_fused_kernel, xpad=xpad),
        out_shape=jax.ShapeDtypeStruct((N, G3), jnp.float32),
        grid=(N // rows,),
        in_specs=[row_spec(xpad), row_spec(GL), row_spec(GL),
                  res_spec(kp["w384"]), res_spec(kp["w128"]), res_spec(kp["bias"]),
                  res_spec(kp["zmask"]), res_spec(kp["zrep"])],
        out_specs=row_spec(G3),
        compiler_params=pltpu.CompilerParams(
            dimension_semantics=("parallel",),
            vmem_limit_bytes=int(vmem_limit)),
    )(x, eh_in, h_in, kp["w384"], kp["w128"], kp["bias"], kp["zmask"], kp["zrep"])

    h = out[:, 0:H]
    enc_h = out[:, GL:GL + He]
    q = out[:, 2 * GL:2 * GL + n_actions]
    return q, h, enc_h


# --------------------------- pure-JAX reference -------------------------------

def _ref_gru(x, h, w_ih, b_ih, w_hh, b_hh, H):
    gi = x @ w_ih + b_ih
    gh = h @ w_hh + b_hh
    r = jax.nn.sigmoid(gi[:, :H] + gh[:, :H])
    u = jax.nn.sigmoid(gi[:, H:2 * H] + gh[:, H:2 * H])
    n = jnp.tanh(gi[:, 2 * H:] + r * gh[:, 2 * H:])
    return (1.0 - u) * n + u * h


def masia_forward_ref(inputs, hidden_state, encoder_hidden_state, p, cfg):
    n_agents = cfg["n_agents"]
    raw_dim = cfg["raw_input_shape"]
    He, H = cfg["encoder_hidden_dim"], cfg["hidden_dim"]
    bs = inputs.shape[0] // n_agents

    ex = jnp.maximum(inputs @ p["enc_w1"] + p["enc_b1"], 0.0)
    enc_h = _ref_gru(ex, encoder_hidden_state, p["enc_wih"], p["enc_bih"],
                     p["enc_whh"], p["enc_bhh"], He)
    z_agent = enc_h @ p["enc_wz"] + p["enc_bz"]
    z = z_agent.reshape(bs, n_agents * cfg["state_repre_dim"])
    rep_z = jnp.repeat(z, n_agents, axis=0)

    weighted = jax.nn.sigmoid(inputs @ p["gate_w"] + p["gate_b"])
    wz = weighted * rep_z
    raw, extra = inputs[:, :raw_dim], inputs[:, raw_dim:]
    ob = raw @ p["ob_w"] + p["ob_b"]
    action_in = jnp.concatenate([ob, wz, extra], axis=-1)
    w1 = jnp.concatenate([p["fc1_wa"], p["fc1_wb"], p["fc1_wc"]], axis=0)
    x = jnp.maximum(action_in @ w1 + p["fc1_b"], 0.0)
    h_in = hidden_state.reshape(-1, H)
    h = _ref_gru(x, h_in, p["rnn_wih"], p["rnn_bih"], p["rnn_whh"], p["rnn_bhh"], H)
    q = h @ p["fc2_w"] + p["fc2_b"]
    return q, h, enc_h


# --------------------------------- main ---------------------------------------

def _init_linear(key, fan_in, fan_out):
    kw, kb = jax.random.split(key)
    bound = 1.0 / jnp.sqrt(fan_in)
    w = jax.random.uniform(kw, (fan_in, fan_out), jnp.float32, -bound, bound)
    b = jax.random.uniform(kb, (1, fan_out), jnp.float32, -bound, bound)
    return w, b


if __name__ == "__main__":
    # small config
    n_agents, bs = 4, 2
    n_actions = 6
    raw_dim = 20                          # raw env obs dim
    input_dim = raw_dim + n_agents        # obs_agent_id=True, obs_last_action=False
    state_repre_dim = 8
    latent_dim = state_repre_dim * n_agents
    ob_embed_dim = 16
    hidden_dim = 32
    encoder_hidden_dim = 32
    N = bs * n_agents

    cfg = dict(n_agents=n_agents, n_actions=n_actions, raw_input_shape=raw_dim,
               state_repre_dim=state_repre_dim, hidden_dim=hidden_dim,
               encoder_hidden_dim=encoder_hidden_dim)

    key = jax.random.PRNGKey(0)
    keys = jax.random.split(key, 16)

    params = {}
    # synthetic AE encoder: Linear -> ReLU -> GRUCell -> Linear head
    params["enc_w1"], params["enc_b1"] = _init_linear(keys[0], input_dim, encoder_hidden_dim)
    params["enc_wih"], params["enc_bih"] = _init_linear(keys[1], encoder_hidden_dim, 3 * encoder_hidden_dim)
    params["enc_whh"], params["enc_bhh"] = _init_linear(keys[2], encoder_hidden_dim, 3 * encoder_hidden_dim)
    params["enc_wz"], params["enc_bz"] = _init_linear(keys[3], encoder_hidden_dim, state_repre_dim)
    # gate: Linear(input_shape, latent_dim)
    params["gate_w"], params["gate_b"] = _init_linear(keys[4], input_dim, latent_dim)
    # ob_fc: Linear(raw_input_shape, ob_embed_dim)
    params["ob_w"], params["ob_b"] = _init_linear(keys[5], raw_dim, ob_embed_dim)
    # fc1: Linear(ob_embed_dim + latent_dim + n_agents, hidden_dim), split by input block
    fc1_in = ob_embed_dim + latent_dim + n_agents
    fc1_w, params["fc1_b"] = _init_linear(keys[6], fc1_in, hidden_dim)
    params["fc1_wa"] = fc1_w[:ob_embed_dim]
    params["fc1_wb"] = fc1_w[ob_embed_dim:ob_embed_dim + latent_dim]
    params["fc1_wc"] = fc1_w[ob_embed_dim + latent_dim:]
    # rnn: GRUCell(hidden_dim, hidden_dim)
    params["rnn_wih"], params["rnn_bih"] = _init_linear(keys[7], hidden_dim, 3 * hidden_dim)
    params["rnn_whh"], params["rnn_bhh"] = _init_linear(keys[8], hidden_dim, 3 * hidden_dim)
    # fc2: Linear(hidden_dim, n_actions)
    params["fc2_w"], params["fc2_b"] = _init_linear(keys[9], hidden_dim, n_actions)

    inputs = jax.random.normal(keys[10], (N, input_dim), jnp.float32)
    hidden_state = jnp.zeros((N, hidden_dim), jnp.float32)          # init_hidden()
    encoder_hidden_state = jnp.zeros((N, encoder_hidden_dim), jnp.float32)

    kparams = prepare_kernel_params(params, cfg, bs)
    fwd = jax.jit(lambda x, h, eh, p: masia_forward(x, h, eh, p, cfg))

    q, h, enc_h = fwd(inputs, hidden_state, encoder_hidden_state, kparams)
    jax.block_until_ready((q, h, enc_h))

    q_r, h_r, eh_r = masia_forward_ref(inputs, hidden_state, encoder_hidden_state, params, cfg)
    assert q.shape == (N, n_actions) and h.shape == (N, hidden_dim)
    assert enc_h.shape == (N, encoder_hidden_dim)
    # bf16 MXU operands (f32 accumulation, f32 carries) -> relaxed tolerance vs f32 ref.
    assert jnp.allclose(q, q_r, atol=3e-2, rtol=3e-2)
    assert jnp.allclose(h, h_r, atol=3e-2, rtol=3e-2)
    assert jnp.allclose(enc_h, eh_r, atol=3e-2, rtol=3e-2)

    print("KERNEL_OK")
</pallas_src>

<mosaic_0001>
module attributes {stable_mosaic.version = 11 : i64} {
  func.func @masia_fused_kernel(%arg0: i32, %arg1: memref<8x32xf32, #tpu.memory_space<vmem>>, %arg2: memref<8x128xf32, #tpu.memory_space<vmem>>, %arg3: memref<8x128xf32, #tpu.memory_space<vmem>>, %arg4: memref<544x384xbf16, #tpu.memory_space<vmem>>, %arg5: memref<384x128xbf16, #tpu.memory_space<vmem>>, %arg6: memref<8x384xf32, #tpu.memory_space<vmem>>, %arg7: memref<8x128xf32, #tpu.memory_space<vmem>>, %arg8: memref<8x8xf32, #tpu.memory_space<vmem>>, %arg9: memref<8x384xf32, #tpu.memory_space<vmem>>) attributes {dimension_semantics = [#tpu.dimension_semantics<parallel>], iteration_bounds = array<i64: 1>, scalar_prefetch = 0 : i64, scratch_operands = 0 : i64, tpu.core_type = #tpu.core_type<tc>, window_params = [{transform_indices = @transform_0, window_bounds = array<i64: 8, 32>}, {transform_indices = @transform_1, window_bounds = array<i64: 8, 128>}, {transform_indices = @transform_2, window_bounds = array<i64: 8, 128>}, {pipeline_mode = #tpu.pipeline_mode<synchronous>, transform_indices = @transform_3, window_bounds = array<i64: 544, 384>}, {pipeline_mode = #tpu.pipeline_mode<synchronous>, transform_indices = @transform_4, window_bounds = array<i64: 384, 128>}, {pipeline_mode = #tpu.pipeline_mode<synchronous>, transform_indices = @transform_5, window_bounds = array<i64: 8, 384>}, {pipeline_mode = #tpu.pipeline_mode<synchronous>, transform_indices = @transform_6, window_bounds = array<i64: 8, 128>}, {pipeline_mode = #tpu.pipeline_mode<synchronous>, transform_indices = @transform_7, window_bounds = array<i64: 8, 8>}, {transform_indices = @transform_8, window_bounds = array<i64: 8, 384>}]} {
    %c0 = arith.constant 0 : index
    %c0_0 = arith.constant 0 : index
    %0 = vector.load %arg1[%c0, %c0_0] : memref<8x32xf32, #tpu.memory_space<vmem>>, vector<8x32xf32>
    %c0_1 = arith.constant 0 : index
    %c0_2 = arith.constant 0 : index
    %1 = vector.load %arg2[%c0_1, %c0_2] : memref<8x128xf32, #tpu.memory_space<vmem>>, vector<8x128xf32>
    %c0_3 = arith.constant 0 : index
    %c0_4 = arith.constant 0 : index
    %2 = vector.load %arg3[%c0_3, %c0_4] : memref<8x128xf32, #tpu.memory_space<vmem>>, vector<8x128xf32>
    %c0_5 = arith.constant 0 : index
    %c0_6 = arith.constant 0 : index
    %3 = vector.load %arg4[%c0_5, %c0_6] : memref<544x384xbf16, #tpu.memory_space<vmem>>, vector<32x384xbf16>
    %4 = arith.truncf %0 : vector<8x32xf32> to vector<8x32xbf16>
    %cst = arith.constant dense<0.000000e+00> : vector<8x384xf32>
    %5 = tpu.matmul %4, %3, %cst {dimension_numbers = #tpu.dot_dimension_numbers<[1], [0], [0], [1], [0, 0, 1, 1], [], []>} : vector<8x32xbf16>, vector<32x384xbf16>, vector<8x384xf32> -> vector<8x384xf32>
    %c0_7 = arith.constant 0 : index
    %c0_8 = arith.constant 0 : index
    %6 = vector.load %arg6[%c0_7, %c0_8] : memref<8x384xf32, #tpu.memory_space<vmem>>, vector<1x384xf32>
    %7 = vector.broadcast %6 : vector<1x384xf32> to vector<8x384xf32>
    %8 = arith.addf %5, %7 : vector<8x384xf32>
    %9 = vector.extract_strided_slice %8 {offsets = [0, 0], sizes = [8, 128], strides = [1, 1]} : vector<8x384xf32> to vector<8x128xf32>
    %cst_9 = arith.constant 0.000000e+00 : f32
    %10 = vector.broadcast %cst_9 : f32 to vector<8x128xf32>
    %11 = arith.maximumf %9, %10 : vector<8x128xf32>
    %12 = vector.extract_strided_slice %8 {offsets = [0, 128], sizes = [8, 128], strides = [1, 1]} : vector<8x384xf32> to vector<8x128xf32>
    %13 = vector.extract_strided_slice %8 {offsets = [0, 256], sizes = [8, 128], strides = [1, 1]} : vector<8x384xf32> to vector<8x128xf32>
    %c32 = arith.constant 32 : index
    %c0_10 = arith.constant 0 : index
    %14 = vector.load %arg4[%c32, %c0_10] : memref<544x384xbf16, #tpu.memory_space<vmem>>, vector<128x384xbf16>
    %15 = arith.truncf %11 : vector<8x128xf32> to vector<8x128xbf16>
    %cst_11 = arith.constant dense<0.000000e+00> : vector<8x384xf32>
    %16 = tpu.matmul %15, %14, %cst_11 {dimension_numbers = #tpu.dot_dimension_numbers<[1], [0], [0], [1], [0, 0, 1, 1], [], []>} : vector<8x128xbf16>, vector<128x384xbf16>, vector<8x384xf32> -> vector<8x384xf32>
    %c1 = arith.constant 1 : index
    %c0_12 = arith.constant 0 : index
    %17 = vector.load %arg6[%c1, %c0_12] : memref<8x384xf32, #tpu.memory_space<vmem>>, vector<1x384xf32>
    %18 = vector.broadcast %17 : vector<1x384xf32> to vector<8x384xf32>
    %19 = arith.addf %16, %18 : vector<8x384xf32>
    %c160 = arith.constant 160 : index
    %c0_13 = arith.constant 0 : index
    %20 = vector.load %arg4[%c160, %c0_13] : memref<544x384xbf16, #tpu.memory_space<vmem>>, vector<128x384xbf16>
    %21 = arith.truncf %1 : vector<8x128xf32> to vector<8x128xbf16>
    %cst_14 = arith.constant dense<0.000000e+00> : vector<8x384xf32>
    %22 = tpu.matmul %21, %20, %cst_14 {dimension_numbers = #tpu.dot_dimension_numbers<[1], [0], [0], [1], [0, 0, 1, 1], [], []>} : vector<8x128xbf16>, vector<128x384xbf16>, vector<8x384xf32> -> vector<8x384xf32>
    %c2 = arith.constant 2 : index
    %c0_15 = arith.constant 0 : index
    %23 = vector.load %arg6[%c2, %c0_15] : memref<8x384xf32, #tpu.memory_space<vmem>>, vector<1x384xf32>
    %24 = vector.broadcast %23 : vector<1x384xf32> to vector<8x384xf32>
    %25 = arith.addf %22, %24 : vector<8x384xf32>
    %26 = vector.extract_strided_slice %19 {offsets = [0, 0], sizes = [8, 128], strides = [1, 1]} : vector<8x384xf32> to vector<8x128xf32>
    %27 = vector.extract_strided_slice %25 {offsets = [0, 0], sizes = [8, 128], strides = [1, 1]} : vector<8x384xf32> to vector<8x128xf32>
    %28 = arith.addf %26, %27 : vector<8x128xf32>
    %29 = arith.negf %28 : vector<8x128xf32>
    %30 = math.exp %29 : vector<8x128xf32>
    %cst_16 = arith.constant 1.000000e+00 : f32
    %31 = vector.broadcast %cst_16 : f32 to vector<8x128xf32>
    %32 = arith.addf %31, %30 : vector<8x128xf32>
    %33 = arith.divf %31, %32 : vector<8x128xf32>
    %34 = vector.extract_strided_slice %19 {offsets = [0, 128], sizes = [8, 128], strides = [1, 1]} : vector<8x384xf32> to vector<8x128xf32>
    %35 = vector.extract_strided_slice %25 {offsets = [0, 128], sizes = [8, 128], strides = [1, 1]} : vector<8x384xf32> to vector<8x128xf32>
    %36 = arith.addf %34, %35 : vector<8x128xf32>
    %37 = arith.negf %36 : vector<8x128xf32>
    %38 = math.exp %37 : vector<8x128xf32>
    %cst_17 = arith.constant 1.000000e+00 : f32
    %39 = vector.broadcast %cst_17 : f32 to vector<8x128xf32>
    %40 = arith.addf %39, %38 : vector<8x128xf32>
    %41 = arith.divf %39, %40 : vector<8x128xf32>
    %42 = vector.extract_strided_slice %19 {offsets = [0, 256], sizes = [8, 128], strides = [1, 1]} : vector<8x384xf32> to vector<8x128xf32>
    %43 = vector.extract_strided_slice %25 {offsets = [0, 256], sizes = [8, 128], strides = [1, 1]} : vector<8x384xf32> to vector<8x128xf32>
    %44 = arith.mulf %33, %43 : vector<8x128xf32>
    %45 = arith.addf %42, %44 : vector<8x128xf32>
    %46 = math.tanh %45 : vector<8x128xf32>
    %cst_18 = arith.constant 1.000000e+00 : f32
    %47 = vector.broadcast %cst_18 : f32 to vector<8x128xf32>
    %48 = arith.subf %47, %41 : vector<8x128xf32>
    %49 = arith.mulf %48, %46 : vector<8x128xf32>
    %50 = arith.mulf %41, %1 : vector<8x128xf32>
    %51 = arith.addf %49, %50 : vector<8x128xf32>
    %c0_19 = arith.constant 0 : index
    %c0_20 = arith.constant 0 : index
    %52 = vector.load %arg5[%c0_19, %c0_20] : memref<384x128xbf16, #tpu.memory_space<vmem>>, vector<128x128xbf16>
    %53 = arith.truncf %51 : vector<8x128xf32> to vector<8x128xbf16>
    %cst_21 = arith.constant dense<0.000000e+00> : vector<8x128xf32>
    %54 = tpu.matmul %53, %52, %cst_21 {dimension_numbers = #tpu.dot_dimension_numbers<[1], [0], [0], [1], [0, 0, 1, 1], [], []>} : vector<8x128xbf16>, vector<128x128xbf16>, vector<8x128xf32> -> vector<8x128xf32>
    %c5 = arith.constant 5 : index
    %c0_22 = arith.constant 0 : index
    %55 = vector.load %arg6[%c5, %c0_22] : memref<8x384xf32, #tpu.memory_space<vmem>>, vector<1x128xf32>
    %56 = vector.broadcast %55 : vector<1x128xf32> to vector<8x128xf32>
    %57 = arith.addf %54, %56 : vector<8x128xf32>
    %c0_23 = arith.constant 0 : index
    %c0_24 = arith.constant 0 : index
    %58 = vector.load %arg7[%c0_23, %c0_24] : memref<8x128xf32, #tpu.memory_space<vmem>>, vector<8x128xf32>
    %59 = arith.mulf %57, %58 : vector<8x128xf32>
    %c0_25 = arith.constant 0 : index
    %c0_26 = arith.constant 0 : index
    %60 = vector.load %arg8[%c0_25, %c0_26] : memref<8x8xf32, #tpu.memory_space<vmem>>, vector<8x8xf32>
    %cst_27 = arith.constant dense<0.000000e+00> : vector<8x128xf32>
    %61 = tpu.matmul %60, %59, %cst_27 {dimension_numbers = #tpu.dot_dimension_numbers<[1], [0], [0], [1], [0, 0, 1, 1], [], []>} : vector<8x8xf32>, vector<8x128xf32>, vector<8x128xf32> -> vector<8x128xf32>
    %62 = arith.negf %12 : vector<8x128xf32>
    %63 = math.exp %62 : vector<8x128xf32>
    %cst_28 = arith.constant 1.000000e+00 : f32
    %64 = vector.broadcast %cst_28 : f32 to vector<8x128xf32>
    %65 = arith.addf %64, %63 : vector<8x128xf32>
    %66 = arith.divf %64, %65 : vector<8x128xf32>
    %67 = arith.mulf %66, %61 : vector<8x128xf32>
    %c128 = arith.constant 128 : index
    %c0_29 = arith.constant 0 : index
    %68 = vector.load %arg5[%c128, %c0_29] : memref<384x128xbf16, #tpu.memory_space<vmem>>, vector<128x128xbf16>
    %69 = arith.truncf %67 : vector<8x128xf32> to vector<8x128xbf16>
    %cst_30 = arith.constant dense<0.000000e+00> : vector<8x128xf32>
    %70 = tpu.matmul %69, %68, %cst_30 {dimension_numbers = #tpu.dot_dimension_numbers<[1], [0], [0], [1], [0, 0, 1, 1], [], []>} : vector<8x128xbf16>, vector<128x128xbf16>, vector<8x128xf32> -> vector<8x128xf32>
    %71 = arith.addf %13, %70 : vector<8x128xf32>
    %cst_31 = arith.constant 0.000000e+00 : f32
    %72 = vector.broadcast %cst_31 : f32 to vector<8x128xf32>
    %73 = arith.maximumf %71, %72 : vector<8x128xf32>
    %c288 = arith.constant 288 : index
    %c0_32 = arith.constant 0 : index
    %74 = vector.load %arg4[%c288, %c0_32] : memref<544x384xbf16, #tpu.memory_space<vmem>>, vector<128x384xbf16>
    %75 = arith.truncf %73 : vector<8x128xf32> to vector<8x128xbf16>
    %cst_33 = arith.constant dense<0.000000e+00> : vector<8x384xf32>
    %76 = tpu.matmul %75, %74, %cst_33 {dimension_numbers = #tpu.dot_dimension_numbers<[1], [0], [0], [1], [0, 0, 1, 1], [], []>} : vector<8x128xbf16>, vector<128x384xbf16>, vector<8x384xf32> -> vector<8x384xf32>
    %c3 = arith.constant 3 : index
    %c0_34 = arith.constant 0 : index
    %77 = vector.load %arg6[%c3, %c0_34] : memref<8x384xf32, #tpu.memory_space<vmem>>, vector<1x384xf32>
    %78 = vector.broadcast %77 : vector<1x384xf32> to vector<8x384xf32>
    %79 = arith.addf %76, %78 : vector<8x384xf32>
    %c416 = arith.constant 416 : index
    %c0_35 = arith.constant 0 : index
    %80 = vector.load %arg4[%c416, %c0_35] : memref<544x384xbf16, #tpu.memory_space<vmem>>, vector<128x384xbf16>
    %81 = arith.truncf %2 : vector<8x128xf32> to vector<8x128xbf16>
    %cst_36 = arith.constant dense<0.000000e+00> : vector<8x384xf32>
    %82 = tpu.matmul %81, %80, %cst_36 {dimension_numbers = #tpu.dot_dimension_numbers<[1], [0], [0], [1], [0, 0, 1, 1], [], []>} : vector<8x128xbf16>, vector<128x384xbf16>, vector<8x384xf32> -> vector<8x384xf32>
    %c4 = arith.constant 4 : index
    %c0_37 = arith.constant 0 : index
    %83 = vector.load %arg6[%c4, %c0_37] : memref<8x384xf32, #tpu.memory_space<vmem>>, vector<1x384xf32>
    %84 = vector.broadcast %83 : vector<1x384xf32> to vector<8x384xf32>
    %85 = arith.addf %82, %84 : vector<8x384xf32>
    %86 = vector.extract_strided_slice %79 {offsets = [0, 0], sizes = [8, 128], strides = [1, 1]} : vector<8x384xf32> to vector<8x128xf32>
    %87 = vector.extract_strided_slice %85 {offsets = [0, 0], sizes = [8, 128], strides = [1, 1]} : vector<8x384xf32> to vector<8x128xf32>
    %88 = arith.addf %86, %87 : vector<8x128xf32>
    %89 = arith.negf %88 : vector<8x128xf32>
    %90 = math.exp %89 : vector<8x128xf32>
    %cst_38 = arith.constant 1.000000e+00 : f32
    %91 = vector.broadcast %cst_38 : f32 to vector<8x128xf32>
    %92 = arith.addf %91, %90 : vector<8x128xf32>
    %93 = arith.divf %91, %92 : vector<8x128xf32>
    %94 = vector.extract_strided_slice %79 {offsets = [0, 128], sizes = [8, 128], strides = [1, 1]} : vector<8x384xf32> to vector<8x128xf32>
    %95 = vector.extract_strided_slice %85 {offsets = [0, 128], sizes = [8, 128], strides = [1, 1]} : vector<8x384xf32> to vector<8x128xf32>
    %96 = arith.addf %94, %95 : vector<8x128xf32>
    %97 = arith.negf %96 : vector<8x128xf32>
    %98 = math.exp %97 : vector<8x128xf32>
    %cst_39 = arith.constant 1.000000e+00 : f32
    %99 = vector.broadcast %cst_39 : f32 to vector<8x128xf32>
    %100 = arith.addf %99, %98 : vector<8x128xf32>
    %101 = arith.divf %99, %100 : vector<8x128xf32>
    %102 = vector.extract_strided_slice %79 {offsets = [0, 256], sizes = [8, 128], strides = [1, 1]} : vector<8x384xf32> to vector<8x128xf32>
    %103 = vector.extract_strided_slice %85 {offsets = [0, 256], sizes = [8, 128], strides = [1, 1]} : vector<8x384xf32> to vector<8x128xf32>
    %104 = arith.mulf %93, %103 : vector<8x128xf32>
    %105 = arith.addf %102, %104 : vector<8x128xf32>
    %106 = math.tanh %105 : vector<8x128xf32>
    %cst_40 = arith.constant 1.000000e+00 : f32
    %107 = vector.broadcast %cst_40 : f32 to vector<8x128xf32>
    %108 = arith.subf %107, %101 : vector<8x128xf32>
    %109 = arith.mulf %108, %106 : vector<8x128xf32>
    %110 = arith.mulf %101, %2 : vector<8x128xf32>
    %111 = arith.addf %109, %110 : vector<8x128xf32>
    %c256 = arith.constant 256 : index
    %c0_41 = arith.constant 0 : index
    %112 = vector.load %arg5[%c256, %c0_41] : memref<384x128xbf16, #tpu.memory_space<vmem>>, vector<128x128xbf16>
    %113 = arith.truncf %111 : vector<8x128xf32> to vector<8x128xbf16>
    %cst_42 = arith.constant dense<0.000000e+00> : vector<8x128xf32>
    %114 = tpu.matmul %113, %112, %cst_42 {dimension_numbers = #tpu.dot_dimension_numbers<[1], [0], [0], [1], [0, 0, 1, 1], [], []>} : vector<8x128xbf16>, vector<128x128xbf16>, vector<8x128xf32> -> vector<8x128xf32>
    %c6 = arith.constant 6 : index
    %c0_43 = arith.constant 0 : index
    %115 = vector.load %arg6[%c6, %c0_43] : memref<8x384xf32, #tpu.memory_space<vmem>>, vector<1x128xf32>
    %116 = vector.broadcast %115 : vector<1x128xf32> to vector<8x128xf32>
    %117 = arith.addf %114, %116 : vector<8x128xf32>
    %c0_44 = arith.constant 0 : index
    %c0_45 = arith.constant 0 : index
    %118 = vector.load %arg9[%c0_44, %c0_45] : memref<8x384xf32, #tpu.memory_space<vmem>>, vector<8x128xf32>
    tpu.vector_store %arg9[%c0_44, %c0_45], %111 {strides = array<i32>} : memref<8x384xf32, #tpu.memory_space<vmem>>, vector<8x128xf32>,
    %c0_46 = arith.constant 0 : index
    %c128_47 = arith.constant 128 : index
    %119 = vector.load %arg9[%c0_46, %c128_47] : memref<8x384xf32, #tpu.memory_space<vmem>>, vector<8x128xf32>
    tpu.vector_store %arg9[%c0_46, %c128_47], %51 {strides = array<i32>} : memref<8x384xf32, #tpu.memory_space<vmem>>, vector<8x128xf32>,
    %c0_48 = arith.constant 0 : index
    %c256_49 = arith.constant 256 : index
    %120 = vector.load %arg9[%c0_48, %c256_49] : memref<8x384xf32, #tpu.memory_space<vmem>>, vector<8x128xf32>
    tpu.vector_store %arg9[%c0_48, %c256_49], %117 {strides = array<i32>} : memref<8x384xf32, #tpu.memory_space<vmem>>, vector<8x128xf32>,
    return
  }
  func.func @transform_0(%arg0: i32) -> (i32, i32) {
    %c0_i32 = arith.constant 0 : i32
    %c0_i32_0 = arith.constant 0 : i32
    return %arg0, %c0_i32 : i32, i32
  }
  func.func @transform_1(%arg0: i32) -> (i32, i32) {
    %c0_i32 = arith.constant 0 : i32
    %c0_i32_0 = arith.constant 0 : i32
    return %arg0, %c0_i32 : i32, i32
  }
  func.func @transform_2(%arg0: i32) -> (i32, i32) {
    %c0_i32 = arith.constant 0 : i32
    %c0_i32_0 = arith.constant 0 : i32
    return %arg0, %c0_i32 : i32, i32
  }
  func.func @transform_3(%arg0: i32) -> (i32, i32) {
    %c0_i32 = arith.constant 0 : i32
    %c0_i32_0 = arith.constant 0 : i32
    %c0_i32_1 = arith.constant 0 : i32
    return %c0_i32, %c0_i32_0 : i32, i32
  }
  func.func @transform_4(%arg0: i32) -> (i32, i32) {
    %c0_i32 = arith.constant 0 : i32
    %c0_i32_0 = arith.constant 0 : i32
    %c0_i32_1 = arith.constant 0 : i32
    return %c0_i32, %c0_i32_0 : i32, i32
  }
  func.func @transform_5(%arg0: i32) -> (i32, i32) {
    %c0_i32 = arith.constant 0 : i32
    %c0_i32_0 = arith.constant 0 : i32
    %c0_i32_1 = arith.constant 0 : i32
    return %c0_i32, %c0_i32_0 : i32, i32
  }
  func.func @transform_6(%arg0: i32) -> (i32, i32) {
    %c0_i32 = arith.constant 0 : i32
    %c0_i32_0 = arith.constant 0 : i32
    %c0_i32_1 = arith.constant 0 : i32
    return %c0_i32, %c0_i32_0 : i32, i32
  }
  func.func @transform_7(%arg0: i32) -> (i32, i32) {
    %c0_i32 = arith.constant 0 : i32
    %c0_i32_0 = arith.constant 0 : i32
    %c0_i32_1 = arith.constant 0 : i32
    return %c0_i32, %c0_i32_0 : i32, i32
  }
  func.func @transform_8(%arg0: i32) -> (i32, i32) {
    %c0_i32 = arith.constant 0 : i32
    %c0_i32_0 = arith.constant 0 : i32
    return %arg0, %c0_i32 : i32, i32
  }
}

</mosaic_0001>

<llo_original>
// kernel: _lambda_.1
$region0: #{_lambda_.1}
  #allocation0 [shape = 'u32[]', space=smem, size = 0x4, offset = 0x4, fixed_abs, tag = 'smem constant byte address 0x4 - core index']
  #allocation1 [shape = 'u32[144,128]{1,0:T(1,128)}', space=vmem, size = 0x12000, scoped, tag = 'internal scratch']
  %s0 = inlined_call_operand.vmem [shape: f32[8,32], index: 0, kind: input, shape index: {}]
  %s1 = inlined_call_operand.vmem [shape: f32[8,128], index: 1, kind: input, shape index: {}]
  %s2 = inlined_call_operand.vmem [shape: f32[8,128], index: 2, kind: input, shape index: {}]
  %s3 = inlined_call_operand.hbm [shape: bf16[544,384], index: 3, kind: input, shape index: {}]
  %s4 = inlined_call_operand.hbm [shape: bf16[384,128], index: 4, kind: input, shape index: {}]
  %s5 = inlined_call_operand.vmem [shape: f32[8,384], index: 5, kind: input, shape index: {}]
  %s6 = inlined_call_operand.vmem [shape: f32[8,128], index: 6, kind: input, shape index: {}]
  %s7 = inlined_call_operand.hbm [shape: f32[8,8], index: 7, kind: input, shape index: {}]
  %s8 = inlined_call_operand.vmem [shape: f32[8,384], index: 8, kind: output, shape index: {}]
  %s9 = sld [smem:[#allocation0]]
  $region54: #{_lambda_.1} parent=0
    _
  %s11 = ssub.s32 1, %s9
  %s12 = scalar_select 0, %s11, %s9
  $region1: #{_lambda_.1} parent=0
    #allocation2 [shape = 'u8[417792]{0}', space=vmem, size = 0x66000, scoped, tag = 'input window, operand 3, single buffered']
    #allocation3 [shape = 's32[1]{0}', space=sflag, size = 0x4, scoped, tag = 'scoped memory for _lambda_.1']
    #allocation4 [shape = 'u8[98304]{0}', space=vmem, size = 0x18000, scoped, tag = 'input window, operand 4, single buffered']
    #allocation5 [shape = 's32[1]{0}', space=sflag, size = 0x4, scoped, tag = 'scoped memory for _lambda_.1']
    #allocation6 [shape = 'u8[4096]{0}', space=vmem, size = 0x1000, scoped, tag = 'input window, operand 7, single buffered']
    %13 = vsyncpa [#allocation3], 0
    %14 = vsyncpa [#allocation5], 0
    // Predicated region
    $region2: #{_lambda_.1} parent=1 // pred_check
      _
    $region3: #{_lambda_.1} parent=1 // pred_check_branch
      %16 = sbr.rel (0) target = $region5
    $region4: #{_lambda_.1} parent=1 // pred_region
      _
    $region5: #{_lambda_.1} parent=1 // pred_fallthru
      _
    // Predicated region
    $region6: #{_lambda_.1} parent=1 // pred_check
      _
    $region7: #{_lambda_.1} parent=1 // pred_check_branch
      %18 = sbr.rel (0) target = $region9
    $region8: #{_lambda_.1} parent=1 // pred_region
      _
    $region9: #{_lambda_.1} parent=1 // pred_fallthru
      _
    // Predicated region
    $region10: #{_lambda_.1} parent=1 // pred_check
      _
    $region11: #{_lambda_.1} parent=1 // pred_check_branch
      %20 = sbr.rel (0) target = $region13
    $region12: #{_lambda_.1} parent=1 // pred_region
      _
    $region13: #{_lambda_.1} parent=1 // pred_fallthru
      _
    // Predicated region
    $region14: #{_lambda_.1} parent=1 // pred_check
      _
    $region15: #{_lambda_.1} parent=1 // pred_check_branch
      %22 = sbr.rel (0) target = $region17
    $region16: #{_lambda_.1} parent=1 // pred_region
      %s24 = ssub.s32 13056, 13056
      %25 = vsyncadd [#allocation3], %s24
      %s26 = sshll.u32 [#allocation2], 4
      %s27 = int_to_ptr.vmem [resolvable:$true] %s26
      %32 = dma.hbm_to_vmem [thread:$0]  %s3, 13056, %s27, [#allocation3], 192, 192, 12
    $region17: #{_lambda_.1} parent=1 // pred_fallthru
      _
    // Predicated region
    $region18: #{_lambda_.1} parent=1 // pred_check
      _
    $region19: #{_lambda_.1} parent=1 // pred_check_branch
      %34 = sbr.rel (0) target = $region21
    $region20: #{_lambda_.1} parent=1 // pred_region
      %s36 = ssub.s32 3072, 3072
      %37 = vsyncadd [#allocation5], %s36
      %s38 = sshll.u32 [#allocation4], 4
      %s39 = int_to_ptr.vmem [resolvable:$true] %s38
      %44 = dma.hbm_to_vmem [thread:$0]  %s4, 3072, %s39, [#allocation5], 64, 64, 4
    $region21: #{_lambda_.1} parent=1 // pred_fallthru
      _
    // Predicated region
    $region22: #{_lambda_.1} parent=1 // pred_check
      _
    $region23: #{_lambda_.1} parent=1 // pred_check_branch
      %46 = sbr.rel (0) target = $region25
    $region24: #{_lambda_.1} parent=1 // pred_region
      _
    $region25: #{_lambda_.1} parent=1 // pred_fallthru
      _
    // Predicated region
    $region26: #{_lambda_.1} parent=1 // pred_check
      _
    $region27: #{_lambda_.1} parent=1 // pred_check_branch
      %48 = sbr.rel (0) target = $region29
    $region28: #{_lambda_.1} parent=1 // pred_region
      _
    $region29: #{_lambda_.1} parent=1 // pred_fallthru
      _
    // Predicated region
    $region30: #{_lambda_.1} parent=1 // pred_check
      _
    $region31: #{_lambda_.1} parent=1 // pred_check_branch
      %50 = sbr.rel (0) target = $region33
    $region32: #{_lambda_.1} parent=1 // pred_region
      %s52 = ssub.s32 128, 128
      %53 = vsyncadd [#allocation5], %s52
      %s55 = sshll.u32 [#allocation6], 4
      %s56 = int_to_ptr.vmem [resolvable:$true] %s55
      %58 = dma.hbm_to_vmem [thread:$0]  %s7, 128, %s56, [#allocation5]
    $region33: #{_lambda_.1} parent=1 // pred_fallthru
      _
    // Predicated region
    $region34: #{_lambda_.1} parent=1 // pred_check
      _
    $region35: #{_lambda_.1} parent=1 // pred_check_branch
      %60 = sbr.rel (0) target = $region37
    $region36: #{_lambda_.1} parent=1 // pred_region
      %61 = dma.done [#allocation3], 13056
    $region37: #{_lambda_.1} parent=1 // pred_fallthru
      _
    // Predicated region
    $region38: #{_lambda_.1} parent=1 // pred_check
      _
    $region39: #{_lambda_.1} parent=1 // pred_check_branch
      %63 = sbr.rel (0) target = $region41
    $region40: #{_lambda_.1} parent=1 // pred_region
      %64 = dma.done [#allocation5], 3072
    $region41: #{_lambda_.1} parent=1 // pred_fallthru
      _
    // Predicated region
    $region42: #{_lambda_.1} parent=1 // pred_check
      _
    $region43: #{_lambda_.1} parent=1 // pred_check_branch
      %66 = sbr.rel (0) target = $region45
    $region44: #{_lambda_.1} parent=1 // pred_region
      %67 = dma.done [#allocation5], 128
    $region45: #{_lambda_.1} parent=1 // pred_fallthru
      _
    %v69 = vld [vmem:[%s0] sm:$0xff]
    %v70 = vld [vmem:[%s1] sm:$0xff]
    %v71 = vld [vmem:[%s2] sm:$0xff]
    %v72 = vld [vmem:[#allocation2] sm:$0xff]
    %v73 = vld [vmem:[#allocation2 + $0x8] sm:$0xf]
    %v74 = vld [vmem:[#allocation2 + $0xc] sm:$0xff]
    %v75 = vld [vmem:[#allocation2 + $0x14] sm:$0xf]
    %v76 = vld [vmem:[#allocation2 + $0x18] sm:$0xff]
    %v77 = vld [vmem:[#allocation2 + $0x20] sm:$0xf]
    %v78 = vld [vmem:[#allocation2 + $0x24] sm:$0xff]
    %v79 = vld [vmem:[#allocation2 + $0x2c] sm:$0xf]
    %v80 = vpack.c.bf16 %v69, %v69
    %v81 = vld [vmem:[%s5] ss:$8 sm:$0x7]
    %v83 = vlaneseq
    %v84 = vshrl.u32 %v83, 7
    %v85 = vsub.s32 0, %v84
    %v86 = vrot.slane %v81, %v85
    %v87 = vlaneseq
    %v88 = vshrl.u32 %v87, 7
    %v89 = vsub.s32 1, %v88
    %v90 = vrot.slane %v81, %v89
    %v91 = vlaneseq
    %v92 = vshrl.u32 %v91, 7
    %v93 = vsub.s32 2, %v92
    %v94 = vrot.slane %v81, %v93
    %v106 = vunpack.c.l.b16 %v72
    %v107 = vunpack.c.h.b16 %v72
    %v108 = vunpack.c.l.b16 %v73
    %v109 = vunpack.c.l.b16 %v74
    %v110 = vunpack.c.h.b16 %v74
    %v111 = vunpack.c.l.b16 %v75
    %v112 = vunpack.c.l.b16 %v76
    %v113 = vunpack.c.h.b16 %v76
    %v114 = vunpack.c.l.b16 %v77
    %v115 = vunpack.c.l.b16 %v78
    %v116 = vunpack.c.h.b16 %v78
    %v117 = vunpack.c.l.b16 %v79
    %v118 = vpack.c.b16 %v109, %v106
    %v119 = vpack.c.b16 %v110, %v107
    %v120 = vpack.c.b16 %v111, %v108
    %v121 = vpack.c.b16 %v115, %v112
    %v122 = vpack.c.b16 %v116, %v113
    %v123 = vpack.c.b16 %v117, %v114
    %vm130 = vcmask 261120
    %v132 = vsel %vm130, %v80, 0
    %134 = vmatprep.subr.bf16.mxu0 0
    %135 = vmatpush1.bf16.msra.mxu0 0
    %136 = vmatprep.subr.bf16.mxu0 0
    %137 = vmatpush1.bf16.msra.mxu0 0
    %138 = vmatprep.subr.bf16.mxu0 0
    %139 = vmatpush1.bf16.msra.mxu0 0
    %140 = vmatprep.subr.bf16.mxu0 0
    %141 = vmatpush1.bf16.msra.mxu0 0
    %142 = vmatprep.subr.bf16.mxu0 0
    %143 = vmatpush1.bf16.msra.mxu0 0
    %144 = vmatprep.subr.bf16.mxu0 0
    %145 = vmatpush1.bf16.msra.mxu0 0
    %146 = vmatprep.subr.bf16.mxu0 %v122
    %147 = vmatpush1.bf16.msra.mxu0 %v121
    %148 = vmatprep.subr.bf16.mxu0 %v119
    %149 = vmatpush1.bf16.msra.mxu0 %v118
    %150 = vmatprep.subr.bf16.mxu0 0
    %151 = vmatpush2.bf16.msra.mxu0 0
    %152 = vmatprep.subr.bf16.mxu0 0
    %153 = vmatpush2.bf16.msra.mxu0 0
    %154 = vmatprep.subr.bf16.mxu0 0
    %155 = vmatpush2.bf16.msra.mxu0 0
    %156 = vmatprep.subr.bf16.mxu0 0
    %157 = vmatpush2.bf16.msra.mxu0 0
    %158 = vmatprep.subr.bf16.mxu0 0
    %159 = vmatpush2.bf16.msra.mxu0 0
    %160 = vmatprep.subr.bf16.mxu0 0
    %161 = vmatpush2.bf16.msra.mxu0 0
    %162 = vmatprep.subr.bf16.mxu0 0
    %163 = vmatpush2.bf16.msra.mxu0 0
    %164 = vmatprep.subr.bf16.mxu0 0
    %165 = vmatpush2.bf16.msra.mxu0 0
    %166 = vmatprep.mubr.bf16.mxu0 0
    %167 = vmatmul.mubr.bf16.gmra.mxu0 %v132
    %v168 = vpop.f32.mrf.mxu0
    %v169 = vadd.f32 %v86, %v168
    %v170 = vpop.f32.mrf.mxu0
    %v171 = vadd.f32 %v90, %v170
    %v172 = vpop.f32.mrf.mxu0
    %v173 = vpop.f32.mrf.mxu0
    %174 = vdwg.mxu0
    %175 = vmatprep.subr.bf16.mxu0 0
    %176 = vmatpush1.bf16.msra.mxu0 0
    %177 = vmatprep.subr.bf16.mxu0 0
    %178 = vmatpush1.bf16.msra.mxu0 0
    %179 = vmatprep.subr.bf16.mxu0 0
    %180 = vmatpush1.bf16.msra.mxu0 0
    %181 = vmatprep.subr.bf16.mxu0 0
    %182 = vmatpush1.bf16.msra.mxu0 0
    %183 = vmatprep.subr.bf16.mxu0 0
    %184 = vmatpush1.bf16.msra.mxu0 0
    %185 = vmatprep.subr.bf16.mxu0 0
    %186 = vmatpush1.bf16.msra.mxu0 0
    %187 = vmatprep.subr.bf16.mxu0 0
    %188 = vmatpush1.bf16.msra.mxu0 %v123
    %189 = vmatprep.subr.bf16.mxu0 0
    %190 = vmatpush1.bf16.msra.mxu0 %v120
    %191 = vmatprep.subr.bf16.mxu0 0
    %192 = vmatpush2.bf16.msra.mxu0 0
    %193 = vmatprep.subr.bf16.mxu0 0
    %194 = vmatpush2.bf16.msra.mxu0 0
    %195 = vmatprep.subr.bf16.mxu0 0
    %196 = vmatpush2.bf16.msra.mxu0 0
    %197 = vmatprep.subr.bf16.mxu0 0
    %198 = vmatpush2.bf16.msra.mxu0 0
    %199 = vmatprep.subr.bf16.mxu0 0
    %200 = vmatpush2.bf16.msra.mxu0 0
    %201 = vmatprep.subr.bf16.mxu0 0
    %202 = vmatpush2.bf16.msra.mxu0 0
    %203 = vmatprep.subr.bf16.mxu0 0
    %204 = vmatpush2.bf16.msra.mxu0 0
    %205 = vmatprep.subr.bf16.mxu0 0
    %206 = vmatpush2.bf16.msra.mxu0 0
    %207 = vmatprep.mubr.bf16.mxu0 0
    %208 = vmatmul.mubr.bf16.gmra.mxu0 %v132
    %v209 = vpop.f32.mrf.mxu0
    %v210 = vadd.f32 %v94, %v209
    %v211 = vpop.f32.mrf.mxu0
    %v212 = vpop.f32.mrf.mxu0
    %v213 = vpop.f32.mrf.mxu0
    %214 = vdwg.mxu0
    %v215 = vmax.f32 %v169, 0.0
    %v216 = vld [vmem:[#allocation2 + $0x30] sm:$0xff]
    %v217 = vld [vmem:[#allocation2 + $0x38] sm:$0xf]
    %v218 = vld [vmem:[#allocation2 + $0x3c] sm:$0xff]
    %v219 = vld [vmem:[#allocation2 + $0x44] sm:$0xf]
    %v220 = vld [vmem:[#allocation2 + $0x48] sm:$0xff]
    %v221 = vld [vmem:[#allocation2 + $0x50] sm:$0xf]
    %v222 = vld [vmem:[#allocation2 + $0x54] sm:$0xff]
    %v223 = vld [vmem:[#allocation2 + $0x5c] sm:$0xf]
    %v224 = vld [vmem:[#allocation2 + $0x60] sm:$0xff]
    %v225 = vld [vmem:[#allocation2 + $0x68] sm:$0xf]
    %v226 = vld [vmem:[#allocation2 + $0x6c] sm:$0xff]
    %v227 = vld [vmem:[#allocation2 + $0x74] sm:$0xf]
    %v228 = vld [vmem:[#allocation2 + $0x78] sm:$0xff]
    %v229 = vld [vmem:[#allocation2 + $0x80] sm:$0xf]
    %v230 = vld [vmem:[#allocation2 + $0x84] sm:$0xff]
    %v231 = vld [vmem:[#allocation2 + $0x8c] sm:$0xf]
    %v232 = vld [vmem:[#allocation2 + $0x90] sm:$0xff]
    %v233 = vld [vmem:[#allocation2 + $0x98] sm:$0xf]
    %v234 = vld [vmem:[#allocation2 + $0x9c] sm:$0xff]
    %v235 = vld [vmem:[#allocation2 + $0xa4] sm:$0xf]
    %v236 = vld [vmem:[#allocation2 + $0xa8] sm:$0xff]
    %v237 = vld [vmem:[#allocation2 + $0xb0] sm:$0xf]
    %v238 = vld [vmem:[#allocation2 + $0xb4] sm:$0xff]
    %v239 = vld [vmem:[#allocation2 + $0xbc] sm:$0xf]
    %v240 = vld [vmem:[#allocation2 + $0xc0] sm:$0xff]
    %v241 = vld [vmem:[#allocation2 + $0xc8] sm:$0xf]
    %v242 = vld [vmem:[#allocation2 + $0xcc] sm:$0xff]
    %v243 = vld [vmem:[#allocation2 + $0xd4] sm:$0xf]
    %v244 = vld [vmem:[#allocation2 + $0xd8] sm:$0xff]
    %v245 = vld [vmem:[#allocation2 + $0xe0] sm:$0xf]
    %v246 = vld [vmem:[#allocation2 + $0xe4] sm:$0xff]
    %v247 = vld [vmem:[#allocation2 + $0xec] sm:$0xf]
    %v248 = vpack.c.bf16 %v215, %v215
    %s249 = scalar_lea.vmem %s5, 1
    %v250 = vld [vmem:[%s249] ss:$8 sm:$0x7]
    %v252 = vlaneseq
    %v253 = vshrl.u32 %v252, 7
    %v254 = vsub.s32 0, %v253
    %v255 = vrot.slane %v250, %v254
    %v256 = vlaneseq
    %v257 = vshrl.u32 %v256, 7
    %v258 = vsub.s32 1, %v257
    %v259 = vrot.slane %v250, %v258
    %v260 = vlaneseq
    %v261 = vshrl.u32 %v260, 7
    %v262 = vsub.s32 2, %v261
    %v263 = vrot.slane %v250, %v262
    %v299 = vunpack.c.l.b16 %v216
    %v300 = vunpack.c.h.b16 %v216
    %v301 = vunpack.c.l.b16 %v217
    %v302 = vunpack.c.l.b16 %v218
    %v303 = vunpack.c.h.b16 %v218
    %v304 = vunpack.c.l.b16 %v219
    %v305 = vunpack.c.l.b16 %v220
    %v306 = vunpack.c.h.b16 %v220
    %v307 = vunpack.c.l.b16 %v221
    %v308 = vunpack.c.l.b16 %v222
    %v309 = vunpack.c.h.b16 %v222
    %v310 = vunpack.c.l.b16 %v223
    %v311 = vunpack.c.l.b16 %v224
    %v312 = vunpack.c.h.b16 %v224
    %v313 = vunpack.c.l.b16 %v225
    %v314 = vunpack.c.l.b16 %v226
    %v315 = vunpack.c.h.b16 %v226
    %v316 = vunpack.c.l.b16 %v227
    %v317 = vunpack.c.l.b16 %v228
    %v318 = vunpack.c.h.b16 %v228
    %v319 = vunpack.c.l.b16 %v229
    %v320 = vunpack.c.l.b16 %v230
    %v321 = vunpack.c.h.b16 %v230
    %v322 = vunpack.c.l.b16 %v231
    %v323 = vunpack.c.l.b16 %v232
    %v324 = vunpack.c.h.b16 %v232
    %v325 = vunpack.c.l.b16 %v233
    %v326 = vunpack.c.l.b16 %v234
    %v327 = vunpack.c.h.b16 %v234
    %v328 = vunpack.c.l.b16 %v235
    %v329 = vunpack.c.l.b16 %v236
    %v330 = vunpack.c.h.b16 %v236
    %v331 = vunpack.c.l.b16 %v237
    %v332 = vunpack.c.l.b16 %v238
    %v333 = vunpack.c.h.b16 %v238
    %v334 = vunpack.c.l.b16 %v239
    %v335 = vunpack.c.l.b16 %v240
    %v336 = vunpack.c.h.b16 %v240
    %v337 = vunpack.c.l.b16 %v241
    %v338 = vunpack.c.l.b16 %v242
    %v339 = vunpack.c.h.b16 %v242
    %v340 = vunpack.c.l.b16 %v243
    %v341 = vunpack.c.l.b16 %v244
    %v342 = vunpack.c.h.b16 %v244
    %v343 = vunpack.c.l.b16 %v245
    %v344 = vunpack.c.l.b16 %v246
    %v345 = vunpack.c.h.b16 %v246
    %v346 = vunpack.c.l.b16 %v247
    %v347 = vpack.c.b16 %v302, %v299
    %v348 = vpack.c.b16 %v303, %v300
    %v349 = vpack.c.b16 %v304, %v301
    %v350 = vpack.c.b16 %v308, %v305
    %v351 = vpack.c.b16 %v309, %v306
    %v352 = vpack.c.b16 %v310, %v307
    %v353 = vpack.c.b16 %v314, %v311
    %v354 = vpack.c.b16 %v315, %v312
    %v355 = vpack.c.b16 %v316, %v313
    %v356 = vpack.c.b16 %v320, %v317
    %v357 = vpack.c.b16 %v321, %v318
    %v358 = vpack.c.b16 %v322, %v319
    %v359 = vpack.c.b16 %v326, %v323
    %v360 = vpack.c.b16 %v327, %v324
    %v361 = vpack.c.b16 %v328, %v325
    %v362 = vpack.c.b16 %v332, %v329
    %v363 = vpack.c.b16 %v333, %v330
    %v364 = vpack.c.b16 %v334, %v331
    %v365 = vpack.c.b16 %v338, %v335
    %v366 = vpack.c.b16 %v339, %v336
    %v367 = vpack.c.b16 %v340, %v337
    %v368 = vpack.c.b16 %v344, %v341
    %v369 = vpack.c.b16 %v345, %v342
    %v370 = vpack.c.b16 %v346, %v343
    %395 = vmatprep.subr.bf16.mxu0 %v369
    %396 = vmatpush1.bf16.msra.mxu0 %v368
    %397 = vmatprep.subr.bf16.mxu0 %v366
    %398 = vmatpush1.bf16.msra.mxu0 %v365
    %399 = vmatprep.subr.bf16.mxu0 %v363
    %400 = vmatpush1.bf16.msra.mxu0 %v362
    %401 = vmatprep.subr.bf16.mxu0 %v360
    %402 = vmatpush1.bf16.msra.mxu0 %v359
    %403 = vmatprep.subr.bf16.mxu0 %v357
    %404 = vmatpush1.bf16.msra.mxu0 %v356
    %405 = vmatprep.subr.bf16.mxu0 %v354
    %406 = vmatpush1.bf16.msra.mxu0 %v353
    %407 = vmatprep.subr.bf16.mxu0 %v351
    %408 = vmatpush1.bf16.msra.mxu0 %v350
    %409 = vmatprep.subr.bf16.mxu0 %v348
    %410 = vmatpush1.bf16.msra.mxu0 %v347
    %411 = vmatprep.subr.bf16.mxu0 0
    %412 = vmatpush2.bf16.msra.mxu0 0
    %413 = vmatprep.subr.bf16.mxu0 0
    %414 = vmatpush2.bf16.msra.mxu0 0
    %415 = vmatprep.subr.bf16.mxu0 0
    %416 = vmatpush2.bf16.msra.mxu0 0
    %417 = vmatprep.subr.bf16.mxu0 0
    %418 = vmatpush2.bf16.msra.mxu0 0
    %419 = vmatprep.subr.bf16.mxu0 0
    %420 = vmatpush2.bf16.msra.mxu0 0
    %421 = vmatprep.subr.bf16.mxu0 0
    %422 = vmatpush2.bf16.msra.mxu0 0
    %423 = vmatprep.subr.bf16.mxu0 0
    %424 = vmatpush2.bf16.msra.mxu0 0
    %425 = vmatprep.subr.bf16.mxu0 0
    %426 = vmatpush2.bf16.msra.mxu0 0
    %427 = vmatprep.mubr.bf16.mxu0 0
    %428 = vmatmul.mubr.bf16.gmra.mxu0 %v248
    %v429 = vpop.f32.mrf.mxu0
    %v430 = vadd.f32 %v255, %v429
    %v431 = vpop.f32.mrf.mxu0
    %v432 = vadd.f32 %v259, %v431
    %v433 = vpop.f32.mrf.mxu0
    %v434 = vpop.f32.mrf.mxu0
    %435 = vdwg.mxu0
    %436 = vmatprep.subr.bf16.mxu0 0
    %437 = vmatpush1.bf16.msra.mxu0 %v370
    %438 = vmatprep.subr.bf16.mxu0 0
    %439 = vmatpush1.bf16.msra.mxu0 %v367
    %440 = vmatprep.subr.bf16.mxu0 0
    %441 = vmatpush1.bf16.msra.mxu0 %v364
    %442 = vmatprep.subr.bf16.mxu0 0
    %443 = vmatpush1.bf16.msra.mxu0 %v361
    %444 = vmatprep.subr.bf16.mxu0 0
    %445 = vmatpush1.bf16.msra.mxu0 %v358
    %446 = vmatprep.subr.bf16.mxu0 0
    %447 = vmatpush1.bf16.msra.mxu0 %v355
    %448 = vmatprep.subr.bf16.mxu0 0
    %449 = vmatpush1.bf16.msra.mxu0 %v352
    %450 = vmatprep.subr.bf16.mxu0 0
    %451 = vmatpush1.bf16.msra.mxu0 %v349
    %452 = vmatprep.subr.bf16.mxu0 0
    %453 = vmatpush2.bf16.msra.mxu0 0
    %454 = vmatprep.subr.bf16.mxu0 0
    %455 = vmatpush2.bf16.msra.mxu0 0
    %456 = vmatprep.subr.bf16.mxu0 0
    %457 = vmatpush2.bf16.msra.mxu0 0
    %458 = vmatprep.subr.bf16.mxu0 0
    %459 = vmatpush2.bf16.msra.mxu0 0
    %460 = vmatprep.subr.bf16.mxu0 0
    %461 = vmatpush2.bf16.msra.mxu0 0
    %462 = vmatprep.subr.bf16.mxu0 0
    %463 = vmatpush2.bf16.msra.mxu0 0
    %464 = vmatprep.subr.bf16.mxu0 0
    %465 = vmatpush2.bf16.msra.mxu0 0
    %466 = vmatprep.subr.bf16.mxu0 0
    %467 = vmatpush2.bf16.msra.mxu0 0
    %468 = vmatprep.mubr.bf16.mxu0 0
    %469 = vmatmul.mubr.bf16.gmra.mxu0 %v248
    %v470 = vpop.f32.mrf.mxu0
    %v471 = vadd.f32 %v263, %v470
    %v472 = vpop.f32.mrf.mxu0
    %v473 = vpop.f32.mrf.mxu0
    %v474 = vpop.f32.mrf.mxu0
    %475 = vdwg.mxu0
    %v476 = vld [vmem:[#allocation2 + $0xf0] sm:$0xff]
    %v477 = vld [vmem:[#allocation2 + $0xf8] sm:$0xf]
    %v478 = vld [vmem:[#allocation2 + $0xfc] sm:$0xff]
    %v479 = vld [vmem:[#allocation2 + $0x104] sm:$0xf]
    %v480 = vld [vmem:[#allocation2 + $0x108] sm:$0xff]
    %v481 = vld [vmem:[#allocation2 + $0x110] sm:$0xf]
    %v482 = vld [vmem:[#allocation2 + $0x114] sm:$0xff]
    %v483 = vld [vmem:[#allocation2 + $0x11c] sm:$0xf]
    %v484 = vld [vmem:[#allocation2 + $0x120] sm:$0xff]
    %v485 = vld [vmem:[#allocation2 + $0x128] sm:$0xf]
    %v486 = vld [vmem:[#allocation2 + $0x12c] sm:$0xff]
    %v487 = vld [vmem:[#allocation2 + $0x134] sm:$0xf]
    %v488 = vld [vmem:[#allocation2 + $0x138] sm:$0xff]
    %v489 = vld [vmem:[#allocation2 + $0x140] sm:$0xf]
    %v490 = vld [vmem:[#allocation2 + $0x144] sm:$0xff]
    %v491 = vld [vmem:[#allocation2 + $0x14c] sm:$0xf]
    %v492 = vld [vmem:[#allocation2 + $0x150] sm:$0xff]
    %v493 = vld [vmem:[#allocation2 + $0x158] sm:$0xf]
    %v494 = vld [vmem:[#allocation2 + $0x15c] sm:$0xff]
    %v495 = vld [vmem:[#allocation2 + $0x164] sm:$0xf]
    %v496 = vld [vmem:[#allocation2 + $0x168] sm:$0xff]
    %v497 = vld [vmem:[#allocation2 + $0x170] sm:$0xf]
    %v498 = vld [vmem:[#allocation2 + $0x174] sm:$0xff]
    %v499 = vld [vmem:[#allocation2 + $0x17c] sm:$0xf]
    %v500 = vld [vmem:[#allocation2 + $0x180] sm:$0xff]
    %v501 = vld [vmem:[#allocation2 + $0x188] sm:$0xf]
    %v502 = vld [vmem:[#allocation2 + $0x18c] sm:$0xff]
    %v503 = vld [vmem:[#allocation2 + $0x194] sm:$0xf]
    %v504 = vld [vmem:[#allocation2 + $0x198] sm:$0xff]
    %v505 = vld [vmem:[#allocation2 + $0x1a0] sm:$0xf]
    %v506 = vld [vmem:[#allocation2 + $0x1a4] sm:$0xff]
    %v507 = vld [vmem:[#allocation2 + $0x1ac] sm:$0xf]
    %v508 = vpack.c.bf16 %v70, %v70
    %s509 = scalar_lea.vmem %s5, 2
    %v510 = vld [vmem:[%s509] ss:$8 sm:$0x7]
    %v512 = vlaneseq
    %v513 = vshrl.u32 %v512, 7
    %v514 = vsub.s32 0, %v513
    %v515 = vrot.slane %v510, %v514
    %v516 = vlaneseq
    %v517 = vshrl.u32 %v516, 7
    %v518 = vsub.s32 1, %v517
    %v519 = vrot.slane %v510, %v518
    %v520 = vlaneseq
    %v521 = vshrl.u32 %v520, 7
    %v522 = vsub.s32 2, %v521
    %v523 = vrot.slane %v510, %v522
    %v559 = vunpack.c.l.b16 %v476
    %v560 = vunpack.c.h.b16 %v476
    %v561 = vunpack.c.l.b16 %v477
    %v562 = vunpack.c.l.b16 %v478
    %v563 = vunpack.c.h.b16 %v478
    %v564 = vunpack.c.l.b16 %v479
    %v565 = vunpack.c.l.b16 %v480
    %v566 = vunpack.c.h.b16 %v480
    %v567 = vunpack.c.l.b16 %v481
    %v568 = vunpack.c.l.b16 %v482
    %v569 = vunpack.c.h.b16 %v482
    %v570 = vunpack.c.l.b16 %v483
    %v571 = vunpack.c.l.b16 %v484
    %v572 = vunpack.c.h.b16 %v484
    %v573 = vunpack.c.l.b16 %v485
    %v574 = vunpack.c.l.b16 %v486
    %v575 = vunpack.c.h.b16 %v486
    %v576 = vunpack.c.l.b16 %v487
    %v577 = vunpack.c.l.b16 %v488
    %v578 = vunpack.c.h.b16 %v488
    %v579 = vunpack.c.l.b16 %v489
    %v580 = vunpack.c.l.b16 %v490
    %v581 = vunpack.c.h.b16 %v490
    %v582 = vunpack.c.l.b16 %v491
    %v583 = vunpack.c.l.b16 %v492
    %v584 = vunpack.c.h.b16 %v492
    %v585 = vunpack.c.l.b16 %v493
    %v586 = vunpack.c.l.b16 %v494
    %v587 = vunpack.c.h.b16 %v494
    %v588 = vunpack.c.l.b16 %v495
    %v589 = vunpack.c.l.b16 %v496
    %v590 = vunpack.c.h.b16 %v496
    %v591 = vunpack.c.l.b16 %v497
    %v592 = vunpack.c.l.b16 %v498
    %v593 = vunpack.c.h.b16 %v498
    %v594 = vunpack.c.l.b16 %v499
    %v595 = vunpack.c.l.b16 %v500
    %v596 = vunpack.c.h.b16 %v500
    %v597 = vunpack.c.l.b16 %v501
    %v598 = vunpack.c.l.b16 %v502
    %v599 = vunpack.c.h.b16 %v502
    %v600 = vunpack.c.l.b16 %v503
    %v601 = vunpack.c.l.b16 %v504
    %v602 = vunpack.c.h.b16 %v504
    %v603 = vunpack.c.l.b16 %v505
    %v604 = vunpack.c.l.b16 %v506
    %v605 = vunpack.c.h.b16 %v506
    %v606 = vunpack.c.l.b16 %v507
    %v607 = vpack.c.b16 %v562, %v559
    %v608 = vpack.c.b16 %v563, %v560
    %v609 = vpack.c.b16 %v564, %v561
    %v610 = vpack.c.b16 %v568, %v565
    %v611 = vpack.c.b16 %v569, %v566
    %v612 = vpack.c.b16 %v570, %v567
    %v613 = vpack.c.b16 %v574, %v571
    %v614 = vpack.c.b16 %v575, %v572
    %v615 = vpack.c.b16 %v576, %v573
    %v616 = vpack.c.b16 %v580, %v577
    %v617 = vpack.c.b16 %v581, %v578
    %v618 = vpack.c.b16 %v582, %v579
    %v619 = vpack.c.b16 %v586, %v583
    %v620 = vpack.c.b16 %v587, %v584
    %v621 = vpack.c.b16 %v588, %v585
    %v622 = vpack.c.b16 %v592, %v589
    %v623 = vpack.c.b16 %v593, %v590
    %v624 = vpack.c.b16 %v594, %v591
    %v625 = vpack.c.b16 %v598, %v595
    %v626 = vpack.c.b16 %v599, %v596
    %v627 = vpack.c.b16 %v600, %v597
    %v628 = vpack.c.b16 %v604, %v601
    %v629 = vpack.c.b16 %v605, %v602
    %v630 = vpack.c.b16 %v606, %v603
    %655 = vmatprep.subr.bf16.mxu0 %v629
    %656 = vmatpush1.bf16.msra.mxu0 %v628
    %657 = vmatprep.subr.bf16.mxu0 %v626
    %658 = vmatpush1.bf16.msra.mxu0 %v625
    %659 = vmatprep.subr.bf16.mxu0 %v623
    %660 = vmatpush1.bf16.msra.mxu0 %v622
    %661 = vmatprep.subr.bf16.mxu0 %v620
    %662 = vmatpush1.bf16.msra.mxu0 %v619
    %663 = vmatprep.subr.bf16.mxu0 %v617
    %664 = vmatpush1.bf16.msra.mxu0 %v616
    %665 = vmatprep.subr.bf16.mxu0 %v614
    %666 = vmatpush1.bf16.msra.mxu0 %v613
    %667 = vmatprep.subr.bf16.mxu0 %v611
    %668 = vmatpush1.bf16.msra.mxu0 %v610
    %669 = vmatprep.subr.bf16.mxu0 %v608
    %670 = vmatpush1.bf16.msra.mxu0 %v607
    %671 = vmatprep.subr.bf16.mxu0 0
    %672 = vmatpush2.bf16.msra.mxu0 0
    %673 = vmatprep.subr.bf16.mxu0 0
    %674 = vmatpush2.bf16.msra.mxu0 0
    %675 = vmatprep.subr.bf16.mxu0 0
    %676 = vmatpush2.bf16.msra.mxu0 0
    %677 = vmatprep.subr.bf16.mxu0 0
    %678 = vmatpush2.bf16.msra.mxu0 0
    %679 = vmatprep.subr.bf16.mxu0 0
    %680 = vmatpush2.bf16.msra.mxu0 0
    %681 = vmatprep.subr.bf16.mxu0 0
    %682 = vmatpush2.bf16.msra.mxu0 0
    %683 = vmatprep.subr.bf16.mxu0 0
    %684 = vmatpush2.bf16.msra.mxu0 0
    %685 = vmatprep.subr.bf16.mxu0 0
    %686 = vmatpush2.bf16.msra.mxu0 0
    %687 = vmatprep.mubr.bf16.mxu0 0
    %688 = vmatmul.mubr.bf16.gmra.mxu0 %v508
    %v689 = vpop.f32.mrf.mxu0
    %v690 = vadd.f32 %v515, %v689
    %v691 = vpop.f32.mrf.mxu0
    %v692 = vadd.f32 %v519, %v691
    %v693 = vpop.f32.mrf.mxu0
    %v694 = vpop.f32.mrf.mxu0
    %695 = vdwg.mxu0
    %696 = vmatprep.subr.bf16.mxu0 0
    %697 = vmatpush1.bf16.msra.mxu0 %v630
    %698 = vmatprep.subr.bf16.mxu0 0
    %699 = vmatpush1.bf16.msra.mxu0 %v627
    %700 = vmatprep.subr.bf16.mxu0 0
    %701 = vmatpush1.bf16.msra.mxu0 %v624
    %702 = vmatprep.subr.bf16.mxu0 0
    %703 = vmatpush1.bf16.msra.mxu0 %v621
    %704 = vmatprep.subr.bf16.mxu0 0
    %705 = vmatpush1.bf16.msra.mxu0 %v618
    %706 = vmatprep.subr.bf16.mxu0 0
    %707 = vmatpush1.bf16.msra.mxu0 %v615
    %708 = vmatprep.subr.bf16.mxu0 0
    %709 = vmatpush1.bf16.msra.mxu0 %v612
    %710 = vmatprep.subr.bf16.mxu0 0
    %711 = vmatpush1.bf16.msra.mxu0 %v609
    %712 = vmatprep.subr.bf16.mxu0 0
    %713 = vmatpush2.bf16.msra.mxu0 0
    %714 = vmatprep.subr.bf16.mxu0 0
    %715 = vmatpush2.bf16.msra.mxu0 0
    %716 = vmatprep.subr.bf16.mxu0 0
    %717 = vmatpush2.bf16.msra.mxu0 0
    %718 = vmatprep.subr.bf16.mxu0 0
    %719 = vmatpush2.bf16.msra.mxu0 0
    %720 = vmatprep.subr.bf16.mxu0 0
    %721 = vmatpush2.bf16.msra.mxu0 0
    %722 = vmatprep.subr.bf16.mxu0 0
    %723 = vmatpush2.bf16.msra.mxu0 0
    %724 = vmatprep.subr.bf16.mxu0 0
    %725 = vmatpush2.bf16.msra.mxu0 0
    %726 = vmatprep.subr.bf16.mxu0 0
    %727 = vmatpush2.bf16.msra.mxu0 0
    %728 = vmatprep.mubr.bf16.mxu0 0
    %729 = vmatmul.mubr.bf16.gmra.mxu0 %v508
    %v730 = vpop.f32.mrf.mxu0
    %v731 = vadd.f32 %v523, %v730
    %v732 = vpop.f32.mrf.mxu0
    %v733 = vpop.f32.mrf.mxu0
    %v734 = vpop.f32.mrf.mxu0
    %735 = vdwg.mxu0
    %v736 = vadd.f32 %v430, %v690
    %v737 = vxor.u32 %v736, 2147483648
    %v738 = vmul.f32 %v737, 1.442695
    %v739 = vpow.pop %v738
    %v740 = vadd.f32 %v739, 1.0
    %v741 = vrcp.pop %v740
    %v742 = vmul.f32 1.0, %v741
    %v743 = vadd.f32 %v432, %v692
    %v744 = vxor.u32 %v743, 2147483648
    %v745 = vmul.f32 %v744, 1.442695
    %v746 = vpow.pop %v745
    %v747 = vadd.f32 %v746, 1.0
    %v748 = vrcp.pop %v747
    %v749 = vmul.f32 1.0, %v748
    %v750 = vmul.f32 %v742, %v731
    %v751 = vadd.f32 %v471, %v750
    %v752 = vtanh.pop %v751
    %v753 = vsub.f32 1.0, %v749
    %v754 = vmul.f32 %v753, %v752
    %v755 = vmul.f32 %v749, %v70
    %v756 = vadd.f32 %v754, %v755
    %v757 = vld [vmem:[#allocation4] sm:$0xf]
    %v758 = vld [vmem:[#allocation4 + $0x4] sm:$0xf]
    %v759 = vld [vmem:[#allocation4 + $0x8] sm:$0xf]
    %v760 = vld [vmem:[#allocation4 + $0xc] sm:$0xf]
    %v761 = vld [vmem:[#allocation4 + $0x10] sm:$0xf]
    %v762 = vld [vmem:[#allocation4 + $0x14] sm:$0xf]
    %v763 = vld [vmem:[#allocation4 + $0x18] sm:$0xf]
    %v764 = vld [vmem:[#allocation4 + $0x1c] sm:$0xf]
    %v765 = vld [vmem:[#allocation4 + $0x20] sm:$0xf]
    %v766 = vld [vmem:[#allocation4 + $0x24] sm:$0xf]
    %v767 = vld [vmem:[#allocation4 + $0x28] sm:$0xf]
    %v768 = vld [vmem:[#allocation4 + $0x2c] sm:$0xf]
    %v769 = vld [vmem:[#allocation4 + $0x30] sm:$0xf]
    %v770 = vld [vmem:[#allocation4 + $0x34] sm:$0xf]
    %v771 = vld [vmem:[#allocation4 + $0x38] sm:$0xf]
    %v772 = vld [vmem:[#allocation4 + $0x3c] sm:$0xf]
    %v773 = vpack.c.bf16 %v756, %v756
    %v774 = vld [vmem:[%s5 + $0x5] ss:$0 sm:$0xff]
    %v791 = vunpack.c.l.b16 %v757
    %v792 = vunpack.c.l.b16 %v758
    %v793 = vunpack.c.l.b16 %v759
    %v794 = vunpack.c.l.b16 %v760
    %v795 = vunpack.c.l.b16 %v761
    %v796 = vunpack.c.l.b16 %v762
    %v797 = vunpack.c.l.b16 %v763
    %v798 = vunpack.c.l.b16 %v764
    %v799 = vunpack.c.l.b16 %v765
    %v800 = vunpack.c.l.b16 %v766
    %v801 = vunpack.c.l.b16 %v767
    %v802 = vunpack.c.l.b16 %v768
    %v803 = vunpack.c.l.b16 %v769
    %v804 = vunpack.c.l.b16 %v770
    %v805 = vunpack.c.l.b16 %v771
    %v806 = vunpack.c.l.b16 %v772
    %v807 = vpack.c.b16 %v792, %v791
    %v808 = vpack.c.b16 %v794, %v793
    %v809 = vpack.c.b16 %v796, %v795
    %v810 = vpack.c.b16 %v798, %v797
    %v811 = vpack.c.b16 %v800, %v799
    %v812 = vpack.c.b16 %v802, %v801
    %v813 = vpack.c.b16 %v804, %v803
    %v814 = vpack.c.b16 %v806, %v805
    %823 = vmatprep.subr.bf16.mxu0 0
    %824 = vmatpush1.bf16.msra.mxu0 %v814
    %825 = vmatprep.subr.bf16.mxu0 0
    %826 = vmatpush1.bf16.msra.mxu0 %v813
    %827 = vmatprep.subr.bf16.mxu0 0
    %828 = vmatpush1.bf16.msra.mxu0 %v812
    %829 = vmatprep.subr.bf16.mxu0 0
    %830 = vmatpush1.bf16.msra.mxu0 %v811
    %831 = vmatprep.subr.bf16.mxu0 0
    %832 = vmatpush1.bf16.msra.mxu0 %v810
    %833 = vmatprep.subr.bf16.mxu0 0
    %834 = vmatpush1.bf16.msra.mxu0 %v809
    %835 = vmatprep.subr.bf16.mxu0 0
    %836 = vmatpush1.bf16.msra.mxu0 %v808
    %837 = vmatprep.subr.bf16.mxu0 0
    %838 = vmatpush1.bf16.msra.mxu0 %v807
    %839 = vmatprep.subr.bf16.mxu0 0
    %840 = vmatpush2.bf16.msra.mxu0 0
    %841 = vmatprep.subr.bf16.mxu0 0
    %842 = vmatpush2.bf16.msra.mxu0 0
    %843 = vmatprep.subr.bf16.mxu0 0
    %844 = vmatpush2.bf16.msra.mxu0 0
    %845 = vmatprep.subr.bf16.mxu0 0
    %846 = vmatpush2.bf16.msra.mxu0 0
    %847 = vmatprep.subr.bf16.mxu0 0
    %848 = vmatpush2.bf16.msra.mxu0 0
    %849 = vmatprep.subr.bf16.mxu0 0
    %850 = vmatpush2.bf16.msra.mxu0 0
    %851 = vmatprep.subr.bf16.mxu0 0
    %852 = vmatpush2.bf16.msra.mxu0 0
    %853 = vmatprep.subr.bf16.mxu0 0
    %854 = vmatpush2.bf16.msra.mxu0 0
    %855 = vmatprep.mubr.bf16.mxu0 0
    %856 = vmatmul.mubr.bf16.gmra.mxu0 %v773
    %v857 = vpop.f32.mrf.mxu0
    %v858 = vadd.f32 %v774, %v857
    %v859 = vpop.f32.mrf.mxu0
    %v860 = vpop.f32.mrf.mxu0
    %v861 = vpop.f32.mrf.mxu0
    %862 = vdwg.mxu0
    %v863 = vld [vmem:[%s6] sm:$0xff]
    %v864 = vmul.f32 %v858, %v863
    %v865 = vld [vmem:[#allocation6] sm:$0xff]
    %vm866 = vcmask 64512
    %v868 = vsel %vm866, %v865, 0
    %870 = vmatprep.subr.mxu0 0.0
    %871 = vmatpush1.msra.mxu0 0.0
    %872 = vmatprep.subr.mxu0 0.0
    %873 = vmatpush1.msra.mxu0 0.0
    %874 = vmatprep.subr.mxu0 0.0
    %875 = vmatpush1.msra.mxu0 0.0
    %876 = vmatprep.subr.mxu0 0.0
    %877 = vmatpush1.msra.mxu0 0.0
    %878 = vmatprep.subr.mxu0 0.0
    %879 = vmatpush1.msra.mxu0 0.0
    %880 = vmatprep.subr.mxu0 0.0
    %881 = vmatpush1.msra.mxu0 0.0
    %882 = vmatprep.subr.mxu0 0.0
    %883 = vmatpush1.msra.mxu0 0.0
    %884 = vmatprep.subr.mxu0 0.0
    %885 = vmatpush1.msra.mxu0 0.0
    %886 = vmatprep.subr.mxu0 0.0
    %887 = vmatpush1.msra.mxu0 0.0
    %888 = vmatprep.subr.mxu0 0.0
    %889 = vmatpush1.msra.mxu0 0.0
    %890 = vmatprep.subr.mxu0 0.0
    %891 = vmatpush1.msra.mxu0 0.0
    %892 = vmatprep.subr.mxu0 0.0
    %893 = vmatpush1.msra.mxu0 0.0
    %894 = vmatprep.subr.mxu0 0.0
    %895 = vmatpush1.msra.mxu0 0.0
    %896 = vmatprep.subr.mxu0 0.0
    %897 = vmatpush1.msra.mxu0 0.0
    %898 = vmatprep.subr.mxu0 0.0
    %899 = vmatpush1.msra.mxu0 0.0
    %900 = vmatprep.subr.mxu0 0.0
    %901 = vmatpush1.msra.mxu0 %v864
    %902 = vmatprep.subr.mxu0 0.0
    %903 = vmatpush2.msra.mxu0 0.0
    %904 = vmatprep.subr.mxu0 0.0
    %905 = vmatpush2.msra.mxu0 0.0
    %906 = vmatprep.subr.mxu0 0.0
    %907 = vmatpush2.msra.mxu0 0.0
    %908 = vmatprep.subr.mxu0 0.0
    %909 = vmatpush2.msra.mxu0 0.0
    %910 = vmatprep.subr.mxu0 0.0
    %911 = vmatpush2.msra.mxu0 0.0
    %912 = vmatprep.subr.mxu0 0.0
    %913 = vmatpush2.msra.mxu0 0.0
    %914 = vmatprep.subr.mxu0 0.0
    %915 = vmatpush2.msra.mxu0 0.0
    %916 = vmatprep.subr.mxu0 0.0
    %917 = vmatpush2.msra.mxu0 0.0
    %918 = vmatprep.subr.mxu0 0.0
    %919 = vmatpush2.msra.mxu0 0.0
    %920 = vmatprep.subr.mxu0 0.0
    %921 = vmatpush2.msra.mxu0 0.0
    %922 = vmatprep.subr.mxu0 0.0
    %923 = vmatpush2.msra.mxu0 0.0
    %924 = vmatprep.subr.mxu0 0.0
    %925 = vmatpush2.msra.mxu0 0.0
    %926 = vmatprep.subr.mxu0 0.0
    %927 = vmatpush2.msra.mxu0 0.0
    %928 = vmatprep.subr.mxu0 0.0
    %929 = vmatpush2.msra.mxu0 0.0
    %930 = vmatprep.subr.mxu0 0.0
    %931 = vmatpush2.msra.mxu0 0.0
    %932 = vmatprep.subr.mxu0 0.0
    %933 = vmatpush2.msra.mxu0 0.0
    %934 = vmatprep.mubr.f32.mxu0 0.0
    %935 = vmatmul.mubr.f32.gmra.mxu0 %v868
    %v936 = vpop.f32.mrf.mxu0
    %v937 = vadd.f32 0.0, %v936
    %v938 = vpop.f32.mrf.mxu0
    %939 = vdwg.mxu0
    %v940 = vxor.u32 %v171, 2147483648
    %v941 = vmul.f32 %v940, 1.442695
    %v942 = vpow.pop %v941
    %v943 = vadd.f32 %v942, 1.0
    %v944 = vrcp.pop %v943
    %v945 = vmul.f32 1.0, %v944
    %v946 = vmul.f32 %v945, %v937
    %v947 = vld [vmem:[#allocation4 + $0x40] sm:$0xf]
    %v948 = vld [vmem:[#allocation4 + $0x44] sm:$0xf]
    %v949 = vld [vmem:[#allocation4 + $0x48] sm:$0xf]
    %v950 = vld [vmem:[#allocation4 + $0x4c] sm:$0xf]
    %v951 = vld [vmem:[#allocation4 + $0x50] sm:$0xf]
    %v952 = vld [vmem:[#allocation4 + $0x54] sm:$0xf]
    %v953 = vld [vmem:[#allocation4 + $0x58] sm:$0xf]
    %v954 = vld [vmem:[#allocation4 + $0x5c] sm:$0xf]
    %v955 = vld [vmem:[#allocation4 + $0x60] sm:$0xf]
    %v956 = vld [vmem:[#allocation4 + $0x64] sm:$0xf]
    %v957 = vld [vmem:[#allocation4 + $0x68] sm:$0xf]
    %v958 = vld [vmem:[#allocation4 + $0x6c] sm:$0xf]
    %v959 = vld [vmem:[#allocation4 + $0x70] sm:$0xf]
    %v960 = vld [vmem:[#allocation4 + $0x74] sm:$0xf]
    %v961 = vld [vmem:[#allocation4 + $0x78] sm:$0xf]
    %v962 = vld [vmem:[#allocation4 + $0x7c] sm:$0xf]
    %v963 = vpack.c.bf16 %v946, %v946
    %v980 = vunpack.c.l.b16 %v947
    %v981 = vunpack.c.l.b16 %v948
    %v982 = vunpack.c.l.b16 %v949
    %v983 = vunpack.c.l.b16 %v950
    %v984 = vunpack.c.l.b16 %v951
    %v985 = vunpack.c.l.b16 %v952
    %v986 = vunpack.c.l.b16 %v953
    %v987 = vunpack.c.l.b16 %v954
    %v988 = vunpack.c.l.b16 %v955
    %v989 = vunpack.c.l.b16 %v956
    %v990 = vunpack.c.l.b16 %v957
    %v991 = vunpack.c.l.b16 %v958
    %v992 = vunpack.c.l.b16 %v959
    %v993 = vunpack.c.l.b16 %v960
    %v994 = vunpack.c.l.b16 %v961
    %v995 = vunpack.c.l.b16 %v962
    %v996 = vpack.c.b16 %v981, %v980
    %v997 = vpack.c.b16 %v983, %v982
    %v998 = vpack.c.b16 %v985, %v984
    %v999 = vpack.c.b16 %v987, %v986
    %v1000 = vpack.c.b16 %v989, %v988
    %v1001 = vpack.c.b16 %v991, %v990
    %v1002 = vpack.c.b16 %v993, %v992
    %v1003 = vpack.c.b16 %v995, %v994
    %1012 = vmatprep.subr.bf16.mxu0 0
    %1013 = vmatpush1.bf16.msra.mxu0 %v1003
    %1014 = vmatprep.subr.bf16.mxu0 0
    %1015 = vmatpush1.bf16.msra.mxu0 %v1002
    %1016 = vmatprep.subr.bf16.mxu0 0
    %1017 = vmatpush1.bf16.msra.mxu0 %v1001
    %1018 = vmatprep.subr.bf16.mxu0 0
    %1019 = vmatpush1.bf16.msra.mxu0 %v1000
    %1020 = vmatprep.subr.bf16.mxu0 0
    %1021 = vmatpush1.bf16.msra.mxu0 %v999
    %1022 = vmatprep.subr.bf16.mxu0 0
    %1023 = vmatpush1.bf16.msra.mxu0 %v998
    %1024 = vmatprep.subr.bf16.mxu0 0
    %1025 = vmatpush1.bf16.msra.mxu0 %v997
    %1026 = vmatprep.subr.bf16.mxu0 0
    %1027 = vmatpush1.bf16.msra.mxu0 %v996
    %1028 = vmatprep.subr.bf16.mxu0 0
    %1029 = vmatpush2.bf16.msra.mxu0 0
    %1030 = vmatprep.subr.bf16.mxu0 0
    %1031 = vmatpush2.bf16.msra.mxu0 0
    %1032 = vmatprep.subr.bf16.mxu0 0
    %1033 = vmatpush2.bf16.msra.mxu0 0
    %1034 = vmatprep.subr.bf16.mxu0 0
    %1035 = vmatpush2.bf16.msra.mxu0 0
    %1036 = vmatprep.subr.bf16.mxu0 0
    %1037 = vmatpush2.bf16.msra.mxu0 0
    %1038 = vmatprep.subr.bf16.mxu0 0
    %1039 = vmatpush2.bf16.msra.mxu0 0
    %1040 = vmatprep.subr.bf16.mxu0 0
    %1041 = vmatpush2.bf16.msra.mxu0 0
    %1042 = vmatprep.subr.bf16.mxu0 0
    %1043 = vmatpush2.bf16.msra.mxu0 0
    %1044 = vmatprep.mubr.bf16.mxu0 0
    %1045 = vmatmul.mubr.bf16.gmra.mxu0 %v963
    %v1046 = vpop.f32.mrf.mxu0
    %v1047 = vadd.f32 0.0, %v1046
    %v1048 = vpop.f32.mrf.mxu0
    %v1049 = vpop.f32.mrf.mxu0
    %v1050 = vpop.f32.mrf.mxu0
    %1051 = vdwg.mxu0
    %v1052 = vadd.f32 %v210, %v1047
    %v1053 = vmax.f32 %v1052, 0.0
    %v1054 = vld [vmem:[#allocation2 + $0x1b0] sm:$0xff]
    %v1055 = vld [vmem:[#allocation2 + $0x1b8] sm:$0xf]
    %v1056 = vld [vmem:[#allocation2 + $0x1bc] sm:$0xff]
    %v1057 = vld [vmem:[#allocation2 + $0x1c4] sm:$0xf]
    %v1058 = vld [vmem:[#allocation2 + $0x1c8] sm:$0xff]
    %v1059 = vld [vmem:[#allocation2 + $0x1d0] sm:$0xf]
    %v1060 = vld [vmem:[#allocation2 + $0x1d4] sm:$0xff]
    %v1061 = vld [vmem:[#allocation2 + $0x1dc] sm:$0xf]
    %v1062 = vld [vmem:[#allocation2 + $0x1e0] sm:$0xff]
    %v1063 = vld [vmem:[#allocation2 + $0x1e8] sm:$0xf]
    %v1064 = vld [vmem:[#allocation2 + $0x1ec] sm:$0xff]
    %v1065 = vld [vmem:[#allocation2 + $0x1f4] sm:$0xf]
    %v1066 = vld [vmem:[#allocation2 + $0x1f8] sm:$0xff]
    %v1067 = vld [vmem:[#allocation2 + $0x200] sm:$0xf]
    %v1068 = vld [vmem:[#allocation2 + $0x204] sm:$0xff]
    %v1069 = vld [vmem:[#allocation2 + $0x20c] sm:$0xf]
    %v1070 = vld [vmem:[#allocation2 + $0x210] sm:$0xff]
    %v1071 = vld [vmem:[#allocation2 + $0x218] sm:$0xf]
    %v1072 = vld [vmem:[#allocation2 + $0x21c] sm:$0xff]
    %v1073 = vld [vmem:[#allocation2 + $0x224] sm:$0xf]
    %v1074 = vld [vmem:[#allocation2 + $0x228] sm:$0xff]
    %v1075 = vld [vmem:[#allocation2 + $0x230] sm:$0xf]
    %v1076 = vld [vmem:[#allocation2 + $0x234] sm:$0xff]
    %v1077 = vld [vmem:[#allocation2 + $0x23c] sm:$0xf]
    %v1078 = vld [vmem:[#allocation2 + $0x240] sm:$0xff]
    %v1079 = vld [vmem:[#allocation2 + $0x248] sm:$0xf]
    %v1080 = vld [vmem:[#allocation2 + $0x24c] sm:$0xff]
    %v1081 = vld [vmem:[#allocation2 + $0x254] sm:$0xf]
    %v1082 = vld [vmem:[#allocation2 + $0x258] sm:$0xff]
    %v1083 = vld [vmem:[#allocation2 + $0x260] sm:$0xf]
    %v1084 = vld [vmem:[#allocation2 + $0x264] sm:$0xff]
    %v1085 = vld [vmem:[#allocation2 + $0x26c] sm:$0xf]
    %v1086 = vpack.c.bf16 %v1053, %v1053
    %s1087 = scalar_lea.vmem %s5, 3
    %v1088 = vld [vmem:[%s1087] ss:$8 sm:$0x7]
    %v1090 = vlaneseq
    %v1091 = vshrl.u32 %v1090, 7
    %v1092 = vsub.s32 0, %v1091
    %v1093 = vrot.slane %v1088, %v1092
    %v1094 = vlaneseq
    %v1095 = vshrl.u32 %v1094, 7
    %v1096 = vsub.s32 1, %v1095
    %v1097 = vrot.slane %v1088, %v1096
    %v1098 = vlaneseq
    %v1099 = vshrl.u32 %v1098, 7
    %v1100 = vsub.s32 2, %v1099
    %v1101 = vrot.slane %v1088, %v1100
    %v1137 = vunpack.c.l.b16 %v1054
    %v1138 = vunpack.c.h.b16 %v1054
    %v1139 = vunpack.c.l.b16 %v1055
    %v1140 = vunpack.c.l.b16 %v1056
    %v1141 = vunpack.c.h.b16 %v1056
    %v1142 = vunpack.c.l.b16 %v1057
    %v1143 = vunpack.c.l.b16 %v1058
    %v1144 = vunpack.c.h.b16 %v1058
    %v1145 = vunpack.c.l.b16 %v1059
    %v1146 = vunpack.c.l.b16 %v1060
    %v1147 = vunpack.c.h.b16 %v1060
    %v1148 = vunpack.c.l.b16 %v1061
    %v1149 = vunpack.c.l.b16 %v1062
    %v1150 = vunpack.c.h.b16 %v1062
    %v1151 = vunpack.c.l.b16 %v1063
    %v1152 = vunpack.c.l.b16 %v1064
    %v1153 = vunpack.c.h.b16 %v1064
    %v1154 = vunpack.c.l.b16 %v1065
    %v1155 = vunpack.c.l.b16 %v1066
    %v1156 = vunpack.c.h.b16 %v1066
    %v1157 = vunpack.c.l.b16 %v1067
    %v1158 = vunpack.c.l.b16 %v1068
    %v1159 = vunpack.c.h.b16 %v1068
    %v1160 = vunpack.c.l.b16 %v1069
    %v1161 = vunpack.c.l.b16 %v1070
    %v1162 = vunpack.c.h.b16 %v1070
    %v1163 = vunpack.c.l.b16 %v1071
    %v1164 = vunpack.c.l.b16 %v1072
    %v1165 = vunpack.c.h.b16 %v1072
    %v1166 = vunpack.c.l.b16 %v1073
    %v1167 = vunpack.c.l.b16 %v1074
    %v1168 = vunpack.c.h.b16 %v1074
    %v1169 = vunpack.c.l.b16 %v1075
    %v1170 = vunpack.c.l.b16 %v1076
    %v1171 = vunpack.c.h.b16 %v1076
    %v1172 = vunpack.c.l.b16 %v1077
    %v1173 = vunpack.c.l.b16 %v1078
    %v1174 = vunpack.c.h.b16 %v1078
    %v1175 = vunpack.c.l.b16 %v1079
    %v1176 = vunpack.c.l.b16 %v1080
    %v1177 = vunpack.c.h.b16 %v1080
    %v1178 = vunpack.c.l.b16 %v1081
    %v1179 = vunpack.c.l.b16 %v1082
    %v1180 = vunpack.c.h.b16 %v1082
    %v1181 = vunpack.c.l.b16 %v1083
    %v1182 = vunpack.c.l.b16 %v1084
    %v1183 = vunpack.c.h.b16 %v1084
    %v1184 = vunpack.c.l.b16 %v1085
    %v1185 = vpack.c.b16 %v1140, %v1137
    %v1186 = vpack.c.b16 %v1141, %v1138
    %v1187 = vpack.c.b16 %v1142, %v1139
    %v1188 = vpack.c.b16 %v1146, %v1143
    %v1189 = vpack.c.b16 %v1147, %v1144
    %v1190 = vpack.c.b16 %v1148, %v1145
    %v1191 = vpack.c.b16 %v1152, %v1149
    %v1192 = vpack.c.b16 %v1153, %v1150
    %v1193 = vpack.c.b16 %v1154, %v1151
    %v1194 = vpack.c.b16 %v1158, %v1155
    %v1195 = vpack.c.b16 %v1159, %v1156
    %v1196 = vpack.c.b16 %v1160, %v1157
    %v1197 = vpack.c.b16 %v1164, %v1161
    %v1198 = vpack.c.b16 %v1165, %v1162
    %v1199 = vpack.c.b16 %v1166, %v1163
    %v1200 = vpack.c.b16 %v1170, %v1167
    %v1201 = vpack.c.b16 %v1171, %v1168
    %v1202 = vpack.c.b16 %v1172, %v1169
    %v1203 = vpack.c.b16 %v1176, %v1173
    %v1204 = vpack.c.b16 %v1177, %v1174
    %v1205 = vpack.c.b16 %v1178, %v1175
    %v1206 = vpack.c.b16 %v1182, %v1179
    %v1207 = vpack.c.b16 %v1183, %v1180
    %v1208 = vpack.c.b16 %v1184, %v1181
    %1233 = vmatprep.subr.bf16.mxu0 %v1207
    %1234 = vmatpush1.bf16.msra.mxu0 %v1206
    %1235 = vmatprep.subr.bf16.mxu0 %v1204
    %1236 = vmatpush1.bf16.msra.mxu0 %v1203
    %1237 = vmatprep.subr.bf16.mxu0 %v1201
    %1238 = vmatpush1.bf16.msra.mxu0 %v1200
    %1239 = vmatprep.subr.bf16.mxu0 %v1198
    %1240 = vmatpush1.bf16.msra.mxu0 %v1197
    %1241 = vmatprep.subr.bf16.mxu0 %v1195
    %1242 = vmatpush1.bf16.msra.mxu0 %v1194
    %1243 = vmatprep.subr.bf16.mxu0 %v1192
    %1244 = vmatpush1.bf16.msra.mxu0 %v1191
    %1245 = vmatprep.subr.bf16.mxu0 %v1189
    %1246 = vmatpush1.bf16.msra.mxu0 %v1188
    %1247 = vmatprep.subr.bf16.mxu0 %v1186
    %1248 = vmatpush1.bf16.msra.mxu0 %v1185
    %1249 = vmatprep.subr.bf16.mxu0 0
    %1250 = vmatpush2.bf16.msra.mxu0 0
    %1251 = vmatprep.subr.bf16.mxu0 0
    %1252 = vmatpush2.bf16.msra.mxu0 0
    %1253 = vmatprep.subr.bf16.mxu0 0
    %1254 = vmatpush2.bf16.msra.mxu0 0
    %1255 = vmatprep.subr.bf16.mxu0 0
    %1256 = vmatpush2.bf16.msra.mxu0 0
    %1257 = vmatprep.subr.bf16.mxu0 0
    %1258 = vmatpush2.bf16.msra.mxu0 0
    %1259 = vmatprep.subr.bf16.mxu0 0
    %1260 = vmatpush2.bf16.msra.mxu0 0
    %1261 = vmatprep.subr.bf16.mxu0 0
    %1262 = vmatpush2.bf16.msra.mxu0 0
    %1263 = vmatprep.subr.bf16.mxu0 0
    %1264 = vmatpush2.bf16.msra.mxu0 0
    %1265 = vmatprep.mubr.bf16.mxu0 0
    %1266 = vmatmul.mubr.bf16.gmra.mxu0 %v1086
    %v1267 = vpop.f32.mrf.mxu0
    %v1268 = vadd.f32 %v1093, %v1267
    %v1269 = vpop.f32.mrf.mxu0
    %v1270 = vadd.f32 %v1097, %v1269
    %v1271 = vpop.f32.mrf.mxu0
    %v1272 = vpop.f32.mrf.mxu0
    %1273 = vdwg.mxu0
    %1274 = vmatprep.subr.bf16.mxu0 0
    %1275 = vmatpush1.bf16.msra.mxu0 %v1208
    %1276 = vmatprep.subr.bf16.mxu0 0
    %1277 = vmatpush1.bf16.msra.mxu0 %v1205
    %1278 = vmatprep.subr.bf16.mxu0 0
    %1279 = vmatpush1.bf16.msra.mxu0 %v1202
    %1280 = vmatprep.subr.bf16.mxu0 0
    %1281 = vmatpush1.bf16.msra.mxu0 %v1199
    %1282 = vmatprep.subr.bf16.mxu0 0
    %1283 = vmatpush1.bf16.msra.mxu0 %v1196
    %1284 = vmatprep.subr.bf16.mxu0 0
    %1285 = vmatpush1.bf16.msra.mxu0 %v1193
    %1286 = vmatprep.subr.bf16.mxu0 0
    %1287 = vmatpush1.bf16.msra.mxu0 %v1190
    %1288 = vmatprep.subr.bf16.mxu0 0
    %1289 = vmatpush1.bf16.msra.mxu0 %v1187
    %1290 = vmatprep.subr.bf16.mxu0 0
    %1291 = vmatpush2.bf16.msra.mxu0 0
    %1292 = vmatprep.subr.bf16.mxu0 0
    %1293 = vmatpush2.bf16.msra.mxu0 0
    %1294 = vmatprep.subr.bf16.mxu0 0
    %1295 = vmatpush2.bf16.msra.mxu0 0
    %1296 = vmatprep.subr.bf16.mxu0 0
    %1297 = vmatpush2.bf16.msra.mxu0 0
    %1298 = vmatprep.subr.bf16.mxu0 0
    %1299 = vmatpush2.bf16.msra.mxu0 0
    %1300 = vmatprep.subr.bf16.mxu0 0
    %1301 = vmatpush2.bf16.msra.mxu0 0
    %1302 = vmatprep.subr.bf16.mxu0 0
    %1303 = vmatpush2.bf16.msra.mxu0 0
    %1304 = vmatprep.subr.bf16.mxu0 0
    %1305 = vmatpush2.bf16.msra.mxu0 0
    %1306 = vmatprep.mubr.bf16.mxu0 0
    %1307 = vmatmul.mubr.bf16.gmra.mxu0 %v1086
    %v1308 = vpop.f32.mrf.mxu0
    %v1309 = vadd.f32 %v1101, %v1308
    %v1310 = vpop.f32.mrf.mxu0
    %v1311 = vpop.f32.mrf.mxu0
    %v1312 = vpop.f32.mrf.mxu0
    %1313 = vdwg.mxu0
    %v1314 = vld [vmem:[#allocation2 + $0x270] sm:$0xff]
    %v1315 = vld [vmem:[#allocation2 + $0x278] sm:$0xf]
    %v1316 = vld [vmem:[#allocation2 + $0x27c] sm:$0xff]
    %v1317 = vld [vmem:[#allocation2 + $0x284] sm:$0xf]
    %v1318 = vld [vmem:[#allocation2 + $0x288] sm:$0xff]
    %v1319 = vld [vmem:[#allocation2 + $0x290] sm:$0xf]
    %v1320 = vld [vmem:[#allocation2 + $0x294] sm:$0xff]
    %v1321 = vld [vmem:[#allocation2 + $0x29c] sm:$0xf]
    %v1322 = vld [vmem:[#allocation2 + $0x2a0] sm:$0xff]
    %v1323 = vld [vmem:[#allocation2 + $0x2a8] sm:$0xf]
    %v1324 = vld [vmem:[#allocation2 + $0x2ac] sm:$0xff]
    %v1325 = vld [vmem:[#allocation2 + $0x2b4] sm:$0xf]
    %v1326 = vld [vmem:[#allocation2 + $0x2b8] sm:$0xff]
    %v1327 = vld [vmem:[#allocation2 + $0x2c0] sm:$0xf]
    %v1328 = vld [vmem:[#allocation2 + $0x2c4] sm:$0xff]
    %v1329 = vld [vmem:[#allocation2 + $0x2cc] sm:$0xf]
    %v1330 = vld [vmem:[#allocation2 + $0x2d0] sm:$0xff]
    %v1331 = vld [vmem:[#allocation2 + $0x2d8] sm:$0xf]
    %v1332 = vld [vmem:[#allocation2 + $0x2dc] sm:$0xff]
    %v1333 = vld [vmem:[#allocation2 + $0x2e4] sm:$0xf]
    %v1334 = vld [vmem:[#allocation2 + $0x2e8] sm:$0xff]
    %v1335 = vld [vmem:[#allocation2 + $0x2f0] sm:$0xf]
    %v1336 = vld [vmem:[#allocation2 + $0x2f4] sm:$0xff]
    %v1337 = vld [vmem:[#allocation2 + $0x2fc] sm:$0xf]
    %v1338 = vld [vmem:[#allocation2 + $0x300] sm:$0xff]
    %v1339 = vld [vmem:[#allocation2 + $0x308] sm:$0xf]
    %v1340 = vld [vmem:[#allocation2 + $0x30c] sm:$0xff]
    %v1341 = vld [vmem:[#allocation2 + $0x314] sm:$0xf]
    %v1342 = vld [vmem:[#allocation2 + $0x318] sm:$0xff]
    %v1343 = vld [vmem:[#allocation2 + $0x320] sm:$0xf]
    %v1344 = vld [vmem:[#allocation2 + $0x324] sm:$0xff]
    %v1345 = vld [vmem:[#allocation2 + $0x32c] sm:$0xf]
    %v1346 = vpack.c.bf16 %v71, %v71
    %s1347 = scalar_lea.vmem %s5, 4
    %v1348 = vld [vmem:[%s1347] ss:$8 sm:$0x7]
    %v1350 = vlaneseq
    %v1351 = vshrl.u32 %v1350, 7
    %v1352 = vsub.s32 0, %v1351
    %v1353 = vrot.slane %v1348, %v1352
    %v1354 = vlaneseq
    %v1355 = vshrl.u32 %v1354, 7
    %v1356 = vsub.s32 1, %v1355
    %v1357 = vrot.slane %v1348, %v1356
    %v1358 = vlaneseq
    %v1359 = vshrl.u32 %v1358, 7
    %v1360 = vsub.s32 2, %v1359
    %v1361 = vrot.slane %v1348, %v1360
    %v1397 = vunpack.c.l.b16 %v1314
    %v1398 = vunpack.c.h.b16 %v1314
    %v1399 = vunpack.c.l.b16 %v1315
    %v1400 = vunpack.c.l.b16 %v1316
    %v1401 = vunpack.c.h.b16 %v1316
    %v1402 = vunpack.c.l.b16 %v1317
    %v1403 = vunpack.c.l.b16 %v1318
    %v1404 = vunpack.c.h.b16 %v1318
    %v1405 = vunpack.c.l.b16 %v1319
    %v1406 = vunpack.c.l.b16 %v1320
    %v1407 = vunpack.c.h.b16 %v1320
    %v1408 = vunpack.c.l.b16 %v1321
    %v1409 = vunpack.c.l.b16 %v1322
    %v1410 = vunpack.c.h.b16 %v1322
    %v1411 = vunpack.c.l.b16 %v1323
    %v1412 = vunpack.c.l.b16 %v1324
    %v1413 = vunpack.c.h.b16 %v1324
    %v1414 = vunpack.c.l.b16 %v1325
    %v1415 = vunpack.c.l.b16 %v1326
    %v1416 = vunpack.c.h.b16 %v1326
    %v1417 = vunpack.c.l.b16 %v1327
    %v1418 = vunpack.c.l.b16 %v1328
    %v1419 = vunpack.c.h.b16 %v1328
    %v1420 = vunpack.c.l.b16 %v1329
    %v1421 = vunpack.c.l.b16 %v1330
    %v1422 = vunpack.c.h.b16 %v1330
    %v1423 = vunpack.c.l.b16 %v1331
    %v1424 = vunpack.c.l.b16 %v1332
    %v1425 = vunpack.c.h.b16 %v1332
    %v1426 = vunpack.c.l.b16 %v1333
    %v1427 = vunpack.c.l.b16 %v1334
    %v1428 = vunpack.c.h.b16 %v1334
    %v1429 = vunpack.c.l.b16 %v1335
    %v1430 = vunpack.c.l.b16 %v1336
    %v1431 = vunpack.c.h.b16 %v1336
    %v1432 = vunpack.c.l.b16 %v1337
    %v1433 = vunpack.c.l.b16 %v1338
    %v1434 = vunpack.c.h.b16 %v1338
    %v1435 = vunpack.c.l.b16 %v1339
    %v1436 = vunpack.c.l.b16 %v1340
    %v1437 = vunpack.c.h.b16 %v1340
    %v1438 = vunpack.c.l.b16 %v1341
    %v1439 = vunpack.c.l.b16 %v1342
    %v1440 = vunpack.c.h.b16 %v1342
    %v1441 = vunpack.c.l.b16 %v1343
    %v1442 = vunpack.c.l.b16 %v1344
    %v1443 = vunpack.c.h.b16 %v1344
    %v1444 = vunpack.c.l.b16 %v1345
    %v1445 = vpack.c.b16 %v1400, %v1397
    %v1446 = vpack.c.b16 %v1401, %v1398
    %v1447 = vpack.c.b16 %v1402, %v1399
    %v1448 = vpack.c.b16 %v1406, %v1403
    %v1449 = vpack.c.b16 %v1407, %v1404
    %v1450 = vpack.c.b16 %v1408, %v1405
    %v1451 = vpack.c.b16 %v1412, %v1409
    %v1452 = vpack.c.b16 %v1413, %v1410
    %v1453 = vpack.c.b16 %v1414, %v1411
    %v1454 = vpack.c.b16 %v1418, %v1415
    %v1455 = vpack.c.b16 %v1419, %v1416
    %v1456 = vpack.c.b16 %v1420, %v1417
    %v1457 = vpack.c.b16 %v1424, %v1421
    %v1458 = vpack.c.b16 %v1425, %v1422
    %v1459 = vpack.c.b16 %v1426, %v1423
    %v1460 = vpack.c.b16 %v1430, %v1427
    %v1461 = vpack.c.b16 %v1431, %v1428
    %v1462 = vpack.c.b16 %v1432, %v1429
    %v1463 = vpack.c.b16 %v1436, %v1433
    %v1464 = vpack.c.b16 %v1437, %v1434
    %v1465 = vpack.c.b16 %v1438, %v1435
    %v1466 = vpack.c.b16 %v1442, %v1439
    %v1467 = vpack.c.b16 %v1443, %v1440
    %v1468 = vpack.c.b16 %v1444, %v1441
    %1493 = vmatprep.subr.bf16.mxu0 %v1467
    %1494 = vmatpush1.bf16.msra.mxu0 %v1466
    %1495 = vmatprep.subr.bf16.mxu0 %v1464
    %1496 = vmatpush1.bf16.msra.mxu0 %v1463
    %1497 = vmatprep.subr.bf16.mxu0 %v1461
    %1498 = vmatpush1.bf16.msra.mxu0 %v1460
    %1499 = vmatprep.subr.bf16.mxu0 %v1458
    %1500 = vmatpush1.bf16.msra.mxu0 %v1457
    %1501 = vmatprep.subr.bf16.mxu0 %v1455
    %1502 = vmatpush1.bf16.msra.mxu0 %v1454
    %1503 = vmatprep.subr.bf16.mxu0 %v1452
    %1504 = vmatpush1.bf16.msra.mxu0 %v1451
    %1505 = vmatprep.subr.bf16.mxu0 %v1449
    %1506 = vmatpush1.bf16.msra.mxu0 %v1448
    %1507 = vmatprep.subr.bf16.mxu0 %v1446
    %1508 = vmatpush1.bf16.msra.mxu0 %v1445
    %1509 = vmatprep.subr.bf16.mxu0 0
    %1510 = vmatpush2.bf16.msra.mxu0 0
    %1511 = vmatprep.subr.bf16.mxu0 0
    %1512 = vmatpush2.bf16.msra.mxu0 0
    %1513 = vmatprep.subr.bf16.mxu0 0
    %1514 = vmatpush2.bf16.msra.mxu0 0
    %1515 = vmatprep.subr.bf16.mxu0 0
    %1516 = vmatpush2.bf16.msra.mxu0 0
    %1517 = vmatprep.subr.bf16.mxu0 0
    %1518 = vmatpush2.bf16.msra.mxu0 0
    %1519 = vmatprep.subr.bf16.mxu0 0
    %1520 = vmatpush2.bf16.msra.mxu0 0
    %1521 = vmatprep.subr.bf16.mxu0 0
    %1522 = vmatpush2.bf16.msra.mxu0 0
    %1523 = vmatprep.subr.bf16.mxu0 0
    %1524 = vmatpush2.bf16.msra.mxu0 0
    %1525 = vmatprep.mubr.bf16.mxu0 0
    %1526 = vmatmul.mubr.bf16.gmra.mxu0 %v1346
    %v1527 = vpop.f32.mrf.mxu0
    %v1528 = vadd.f32 %v1353, %v1527
    %v1529 = vpop.f32.mrf.mxu0
    %v1530 = vadd.f32 %v1357, %v1529
    %v1531 = vpop.f32.mrf.mxu0
    %v1532 = vpop.f32.mrf.mxu0
    %1533 = vdwg.mxu0
    %1534 = vmatprep.subr.bf16.mxu0 0
    %1535 = vmatpush1.bf16.msra.mxu0 %v1468
    %1536 = vmatprep.subr.bf16.mxu0 0
    %1537 = vmatpush1.bf16.msra.mxu0 %v1465
    %1538 = vmatprep.subr.bf16.mxu0 0
    %1539 = vmatpush1.bf16.msra.mxu0 %v1462
    %1540 = vmatprep.subr.bf16.mxu0 0
    %1541 = vmatpush1.bf16.msra.mxu0 %v1459
    %1542 = vmatprep.subr.bf16.mxu0 0
    %1543 = vmatpush1.bf16.msra.mxu0 %v1456
    %1544 = vmatprep.subr.bf16.mxu0 0
    %1545 = vmatpush1.bf16.msra.mxu0 %v1453
    %1546 = vmatprep.subr.bf16.mxu0 0
    %1547 = vmatpush1.bf16.msra.mxu0 %v1450
    %1548 = vmatprep.subr.bf16.mxu0 0
    %1549 = vmatpush1.bf16.msra.mxu0 %v1447
    %1550 = vmatprep.subr.bf16.mxu0 0
    %1551 = vmatpush2.bf16.msra.mxu0 0
    %1552 = vmatprep.subr.bf16.mxu0 0
    %1553 = vmatpush2.bf16.msra.mxu0 0
    %1554 = vmatprep.subr.bf16.mxu0 0
    %1555 = vmatpush2.bf16.msra.mxu0 0
    %1556 = vmatprep.subr.bf16.mxu0 0
    %1557 = vmatpush2.bf16.msra.mxu0 0
    %1558 = vmatprep.subr.bf16.mxu0 0
    %1559 = vmatpush2.bf16.msra.mxu0 0
    %1560 = vmatprep.subr.bf16.mxu0 0
    %1561 = vmatpush2.bf16.msra.mxu0 0
    %1562 = vmatprep.subr.bf16.mxu0 0
    %1563 = vmatpush2.bf16.msra.mxu0 0
    %1564 = vmatprep.subr.bf16.mxu0 0
    %1565 = vmatpush2.bf16.msra.mxu0 0
    %1566 = vmatprep.mubr.bf16.mxu0 0
    %1567 = vmatmul.mubr.bf16.gmra.mxu0 %v1346
    %v1568 = vpop.f32.mrf.mxu0
    %v1569 = vadd.f32 %v1361, %v1568
    %v1570 = vpop.f32.mrf.mxu0
    %v1571 = vpop.f32.mrf.mxu0
    %v1572 = vpop.f32.mrf.mxu0
    %1573 = vdwg.mxu0
    %v1574 = vadd.f32 %v1268, %v1528
    %v1575 = vxor.u32 %v1574, 2147483648
    %v1576 = vmul.f32 %v1575, 1.442695
    %v1577 = vpow.pop %v1576
    %v1578 = vadd.f32 %v1577, 1.0
    %v1579 = vrcp.pop %v1578
    %v1580 = vmul.f32 1.0, %v1579
    %v1581 = vadd.f32 %v1270, %v1530
    %v1582 = vxor.u32 %v1581, 2147483648
    %v1583 = vmul.f32 %v1582, 1.442695
    %v1584 = vpow.pop %v1583
    %v1585 = vadd.f32 %v1584, 1.0
    %v1586 = vrcp.pop %v1585
    %v1587 = vmul.f32 1.0, %v1586
    %v1588 = vmul.f32 %v1580, %v1569
    %v1589 = vadd.f32 %v1309, %v1588
    %v1590 = vtanh.pop %v1589
    %v1591 = vsub.f32 1.0, %v1587
    %v1592 = vmul.f32 %v1591, %v1590
    %v1593 = vmul.f32 %v1587, %v71
    %v1594 = vadd.f32 %v1592, %v1593
    %v1595 = vld [vmem:[#allocation4 + $0x80] sm:$0xf]
    %v1596 = vld [vmem:[#allocation4 + $0x84] sm:$0xf]
    %v1597 = vld [vmem:[#allocation4 + $0x88] sm:$0xf]
    %v1598 = vld [vmem:[#allocation4 + $0x8c] sm:$0xf]
    %v1599 = vld [vmem:[#allocation4 + $0x90] sm:$0xf]
    %v1600 = vld [vmem:[#allocation4 + $0x94] sm:$0xf]
    %v1601 = vld [vmem:[#allocation4 + $0x98] sm:$0xf]
    %v1602 = vld [vmem:[#allocation4 + $0x9c] sm:$0xf]
    %v1603 = vld [vmem:[#allocation4 + $0xa0] sm:$0xf]
    %v1604 = vld [vmem:[#allocation4 + $0xa4] sm:$0xf]
    %v1605 = vld [vmem:[#allocation4 + $0xa8] sm:$0xf]
    %v1606 = vld [vmem:[#allocation4 + $0xac] sm:$0xf]
    %v1607 = vld [vmem:[#allocation4 + $0xb0] sm:$0xf]
    %v1608 = vld [vmem:[#allocation4 + $0xb4] sm:$0xf]
    %v1609 = vld [vmem:[#allocation4 + $0xb8] sm:$0xf]
    %v1610 = vld [vmem:[#allocation4 + $0xbc] sm:$0xf]
    %v1611 = vpack.c.bf16 %v1594, %v1594
    %v1612 = vld [vmem:[%s5 + $0x6] ss:$0 sm:$0xff]
    %v1629 = vunpack.c.l.b16 %v1595
    %v1630 = vunpack.c.l.b16 %v1596
    %v1631 = vunpack.c.l.b16 %v1597
    %v1632 = vunpack.c.l.b16 %v1598
    %v1633 = vunpack.c.l.b16 %v1599
    %v1634 = vunpack.c.l.b16 %v1600
    %v1635 = vunpack.c.l.b16 %v1601
    %v1636 = vunpack.c.l.b16 %v1602
    %v1637 = vunpack.c.l.b16 %v1603
    %v1638 = vunpack.c.l.b16 %v1604
    %v1639 = vunpack.c.l.b16 %v1605
    %v1640 = vunpack.c.l.b16 %v1606
    %v1641 = vunpack.c.l.b16 %v1607
    %v1642 = vunpack.c.l.b16 %v1608
    %v1643 = vunpack.c.l.b16 %v1609
    %v1644 = vunpack.c.l.b16 %v1610
    %v1645 = vpack.c.b16 %v1630, %v1629
    %v1646 = vpack.c.b16 %v1632, %v1631
    %v1647 = vpack.c.b16 %v1634, %v1633
    %v1648 = vpack.c.b16 %v1636, %v1635
    %v1649 = vpack.c.b16 %v1638, %v1637
    %v1650 = vpack.c.b16 %v1640, %v1639
    %v1651 = vpack.c.b16 %v1642, %v1641
    %v1652 = vpack.c.b16 %v1644, %v1643
    %1661 = vmatprep.subr.bf16.mxu0 0
    %1662 = vmatpush1.bf16.msra.mxu0 %v1652
    %1663 = vmatprep.subr.bf16.mxu0 0
    %1664 = vmatpush1.bf16.msra.mxu0 %v1651
    %1665 = vmatprep.subr.bf16.mxu0 0
    %1666 = vmatpush1.bf16.msra.mxu0 %v1650
    %1667 = vmatprep.subr.bf16.mxu0 0
    %1668 = vmatpush1.bf16.msra.mxu0 %v1649
    %1669 = vmatprep.subr.bf16.mxu0 0
    %1670 = vmatpush1.bf16.msra.mxu0 %v1648
    %1671 = vmatprep.subr.bf16.mxu0 0
    %1672 = vmatpush1.bf16.msra.mxu0 %v1647
    %1673 = vmatprep.subr.bf16.mxu0 0
    %1674 = vmatpush1.bf16.msra.mxu0 %v1646
    %1675 = vmatprep.subr.bf16.mxu0 0
    %1676 = vmatpush1.bf16.msra.mxu0 %v1645
    %1677 = vmatprep.subr.bf16.mxu0 0
    %1678 = vmatpush2.bf16.msra.mxu0 0
    %1679 = vmatprep.subr.bf16.mxu0 0
    %1680 = vmatpush2.bf16.msra.mxu0 0
    %1681 = vmatprep.subr.bf16.mxu0 0
    %1682 = vmatpush2.bf16.msra.mxu0 0
    %1683 = vmatprep.subr.bf16.mxu0 0
    %1684 = vmatpush2.bf16.msra.mxu0 0
    %1685 = vmatprep.subr.bf16.mxu0 0
    %1686 = vmatpush2.bf16.msra.mxu0 0
    %1687 = vmatprep.subr.bf16.mxu0 0
    %1688 = vmatpush2.bf16.msra.mxu0 0
    %1689 = vmatprep.subr.bf16.mxu0 0
    %1690 = vmatpush2.bf16.msra.mxu0 0
    %1691 = vmatprep.subr.bf16.mxu0 0
    %1692 = vmatpush2.bf16.msra.mxu0 0
    %1693 = vmatprep.mubr.bf16.mxu0 0
    %1694 = vmatmul.mubr.bf16.gmra.mxu0 %v1611
    %v1695 = vpop.f32.mrf.mxu0
    %v1696 = vadd.f32 %v1612, %v1695
    %v1697 = vpop.f32.mrf.mxu0
    %v1698 = vpop.f32.mrf.mxu0
    %v1699 = vpop.f32.mrf.mxu0
    %1700 = vdwg.mxu0
    %1701 = vst [vmem:[%s8] sm:$0xff] %v1594
    %1702 = vst [vmem:[%s8 + $0x8] sm:$0xff] %v756
    %1703 = vst [vmem:[%s8 + $0x10] sm:$0xff] %v1696
    // Predicated region
    $region46: #{_lambda_.1} parent=1 // pred_check
      _
    $region47: #{_lambda_.1} parent=1 // pred_check_branch
      %1705 = sbr.rel (0) target = $region49
    $region48: #{_lambda_.1} parent=1 // pred_region
      _
    $region49: #{_lambda_.1} parent=1 // pred_fallthru
      _
    // Predicated region
    $region50: #{_lambda_.1} parent=1 // pred_check
      _
    $region51: #{_lambda_.1} parent=1 // pred_check_branch
      %1707 = sbr.rel (0) target = $region53
    $region52: #{_lambda_.1} parent=1 // pred_region
      _
    $region53: #{_lambda_.1} parent=1 // pred_fallthru
      _
    %1708 = vsyncpa [#allocation3], 1
    %1709 = vsyncpa [#allocation5], 1

</llo_original>
